<compile_context>
chip_gen: v7x
topology: tpu7x:2x2x1
jax: 0.10.0
libtpu: 0.0.40
codegen_flags: <defaults>
</compile_context>

<pallas_src>
import functools

import jax
import jax.numpy as jnp
from jax.experimental import pallas as pl
from jax.experimental.pallas import tpu as pltpu


# ------------------------------ Pallas kernel --------------------------------


def _chunked(rows, off, width, nums_head):
    """Gather the H lane-chunks [off + c*width, off + (c+1)*width) of `rows`
    and stack them along the row axis ("chunk order"): result row i = c*SH + r
    holds true sequence position s = r*H + c of this group."""
    return jnp.concatenate(
        [rows[:, off + c * width: off + (c + 1) * width] for c in range(nums_head)],
        axis=0)


def _fused_mha_kernel(x_ref, w_ref, b_ref, out_ref, *,
                      batch, seq, input_dim, dim_k, dim_v, nums_head, mxu_dtype):
    """Fused QKV projection + (scrambled-head) attention + dense slab store.

    x_ref:   (B*S, D)            float32
    w_ref:   (D, 2*dim_k+dim_v)  packed Wq.T | Wk.T | Wv.T (mxu_dtype)
    b_ref:   (1, 2*dim_k+dim_v)  float32
    out_ref: (B*S, dim_v)        float32  -- raw (B,S,dim_v) slab, reshaped free
    """
    del input_dim
    H = nums_head
    SH = seq // H            # projection-buffer rows owned by one (h, b) group
    dk_h = dim_k // H
    dv_h = dim_v // H
    G = H * batch            # number of independent attention groups

    # --- fused Q|K|V projection: one MXU pass over the packed weight ---------
    x = x_ref[...].astype(mxu_dtype)
    w = w_ref[...].astype(mxu_dtype)          # no-op if packed in mxu_dtype
    qkv = jnp.dot(x, w, preferred_element_type=jnp.float32) + b_ref[...]

    out_blocks = []
    for g in range(G):                        # static, fully unrolled (G small)
        rows = qkv[g * SH:(g + 1) * SH, :]    # (SH, N) rows of this group

        # Chunk-order views of Q_g, K_g, V_g (all share the same row permutation
        # p(i) = (i % SH) * H + i // SH, so attention below is the true result
        # with rows permuted by p).
        q = _chunked(rows, 0, dk_h, H)                    # (S, dk_h)
        k = _chunked(rows, dim_k, dk_h, H)                # (S, dk_h)
        v = _chunked(rows, 2 * dim_k, dv_h, H)            # (S, dv_h)

        # NOTE: no 1/sqrt(dim_k) scale -- the reference forward omits it.
        s = jnp.einsum("sd,td->st", q.astype(mxu_dtype), k.astype(mxu_dtype),
                       preferred_element_type=jnp.float32)
        m = jnp.max(s, axis=-1, keepdims=True)            # softmax in f32
        p = jnp.exp(s - m)
        inv = pl.reciprocal(jnp.sum(p, axis=-1, keepdims=True), approx=True)
        p = p * inv
        o = jnp.dot(p.astype(mxu_dtype), v.astype(mxu_dtype),
                    preferred_element_type=jnp.float32)   # (S, dv_h), chunk order

        # Undo the permutation while assembling the final slab:
        #   out2d[g*SH + r, c*dv_h + e] = o[c*SH + r, e]
        # i.e. a pure lane-concat over chunks -> (SH, dim_v), full output width.
        out_blocks.append(jnp.concatenate(
            [o[c * SH:(c + 1) * SH, :] for c in range(H)], axis=1))

    # Single dense (B*S, dim_v) store.
    out_ref[...] = jnp.concatenate(out_blocks, axis=0).astype(out_ref.dtype)


# -------------------------------- Wrappers ------------------------------------


def pack_qkv_params(wq, bq, wk, bk, wv, bv, mxu_dtype=jnp.bfloat16):
    """One-time packing (at setup, not per forward): Wq.T|Wk.T|Wv.T in the MXU
    dtype (halves weight DMA for bf16), bias kept f32 (added post-accumulate)."""
    w_packed = jnp.concatenate([wq.T, wk.T, wv.T], axis=1).astype(mxu_dtype)
    b_packed = jnp.concatenate([bq, bk, bv]).reshape(1, -1).astype(jnp.float32)
    return w_packed, b_packed


def self_attention_multi_head(x, w_qkv, b_qkv, dim_k, dim_v, nums_head,
                              mxu_dtype=jnp.bfloat16):
    """x: (B, S, input_dim) float32.  Returns (B, S, dim_v) float32."""
    B, S, D = x.shape
    H = nums_head
    assert dim_k % H == 0 and dim_v % H == 0
    # TODO(synk): the fused in-kernel scramble assumes S % nums_head == 0 so a
    # (head, batch) group owns whole projection-buffer rows; for general S (or
    # long S needing flash KV tiling) use a two-call split where the raw
    # reshape is a free XLA bitcast between the calls.
    assert S % H == 0
    R = B * S
    N = 2 * dim_k + dim_v

    kernel = functools.partial(
        _fused_mha_kernel, batch=B, seq=S, input_dim=D, dim_k=dim_k,
        dim_v=dim_v, nums_head=H, mxu_dtype=mxu_dtype)

    flops = 2 * R * D * N + H * B * (2 * S * S * (dim_k // H)
                                     + 2 * S * S * (dim_v // H))
    bytes_accessed = (4 * R * D + int(w_qkv.size) * w_qkv.dtype.itemsize
                      + 4 * N + 4 * R * dim_v)

    out2d = pl.pallas_call(
        kernel,
        out_shape=jax.ShapeDtypeStruct((R, dim_v), jnp.float32),
        cost_estimate=pl.CostEstimate(flops=int(flops),
                                      transcendentals=int(H * B * S * S),
                                      bytes_accessed=int(bytes_accessed)),
        compiler_params=pltpu.CompilerParams(vmem_limit_bytes=32 * 1024 * 1024),
    )(x.reshape(R, D), w_qkv, b_qkv)

    # Raw row-major reshape back to (B, S, dim_v), exactly as in PyTorch (free).
    return out2d.reshape(B, S, dim_v)


# ----------------------------- Reference (JAX) --------------------------------


def _reference(x, params, nums_head):
    wq, bq, wk, bk, wv, bv = params
    B, S, _ = x.shape
    dim_k, dim_v = wq.shape[0], wv.shape[0]
    H = nums_head
    Q = (x @ wq.T + bq).reshape(H, B, S, dim_k // H)
    K = (x @ wk.T + bk).reshape(H, B, S, dim_k // H)
    V = (x @ wv.T + bv).reshape(H, B, S, dim_v // H)
    atten = jax.nn.softmax(jnp.einsum("hbsd,hbtd->hbst", Q, K), axis=-1)
    return jnp.einsum("hbst,hbtd->hbsd", atten, V).reshape(B, S, -1)


# ---------------------------------- Main ---------------------------------------


def _init_linear(key, in_features, out_features):
    """Deterministic nn.Linear-style init: U(-1/sqrt(in), 1/sqrt(in))."""
    kw, kb = jax.random.split(key)
    bound = 1.0 / jnp.sqrt(jnp.float32(in_features))
    w = jax.random.uniform(kw, (out_features, in_features), jnp.float32,
                           -bound, bound)
    b = jax.random.uniform(kb, (out_features,), jnp.float32, -bound, bound)
    return w, b


if __name__ == "__main__":
    batch, seq, input_dim = 2, 8, 32
    dim_k, dim_v, nums_head = 32, 32, 4

    key = jax.random.PRNGKey(0)
    kx, kq, kk, kv = jax.random.split(key, 4)

    x = jax.random.normal(kx, (batch, seq, input_dim), jnp.float32)
    wq, bq = _init_linear(kq, input_dim, dim_k)
    wk, bk = _init_linear(kk, input_dim, dim_k)
    wv, bv = _init_linear(kv, input_dim, dim_v)

    ref = _reference(x, (wq, bq, wk, bk, wv, bv), nums_head)

    # f32 MXU path: tight parity with the f32 reference (approx reciprocal ~1e-3).
    w32, b32 = pack_qkv_params(wq, bq, wk, bk, wv, bv, mxu_dtype=jnp.float32)
    out32 = jax.block_until_ready(
        self_attention_multi_head(x, w32, b32, dim_k, dim_v, nums_head,
                                  mxu_dtype=jnp.float32))
    assert out32.shape == (batch, seq, dim_v)
    assert jnp.allclose(out32, ref, rtol=5e-3, atol=5e-3)

    # bf16 MXU path (per perf review): matmul inputs bf16, softmax/accum in f32.
    wbf, bbf = pack_qkv_params(wq, bq, wk, bk, wv, bv, mxu_dtype=jnp.bfloat16)
    outbf = jax.block_until_ready(
        self_attention_multi_head(x, wbf, bbf, dim_k, dim_v, nums_head,
                                  mxu_dtype=jnp.bfloat16))
    assert outbf.shape == (batch, seq, dim_v)
    assert jnp.allclose(outbf, ref, rtol=3e-2, atol=3e-2)

    print("KERNEL_OK")
</pallas_src>

<mosaic_0001>
module attributes {stable_mosaic.version = 11 : i64} {
  func.func @_fused_mha_kernel(%arg0: memref<16x32xf32, #tpu.memory_space<vmem>>, %arg1: memref<32x96xf32, #tpu.memory_space<vmem>>, %arg2: memref<1x96xf32, #tpu.memory_space<vmem>>, %arg3: memref<16x32xf32, #tpu.memory_space<vmem>>) attributes {dimension_semantics = [], scalar_prefetch = 0 : i64, scratch_operands = 0 : i64, tpu.core_type = #tpu.core_type<tc>} {
    %c0 = arith.constant 0 : index
    %c0_0 = arith.constant 0 : index
    %0 = vector.load %arg0[%c0, %c0_0] : memref<16x32xf32, #tpu.memory_space<vmem>>, vector<16x32xf32>
    %c0_1 = arith.constant 0 : index
    %c0_2 = arith.constant 0 : index
    %1 = vector.load %arg1[%c0_1, %c0_2] : memref<32x96xf32, #tpu.memory_space<vmem>>, vector<32x96xf32>
    %cst = arith.constant dense<0.000000e+00> : vector<16x96xf32>
    %2 = tpu.matmul %0, %1, %cst {dimension_numbers = #tpu.dot_dimension_numbers<[1], [0], [0], [1], [0, 0, 1, 1], [], []>} : vector<16x32xf32>, vector<32x96xf32>, vector<16x96xf32> -> vector<16x96xf32>
    %c0_3 = arith.constant 0 : index
    %c0_4 = arith.constant 0 : index
    %3 = vector.load %arg2[%c0_3, %c0_4] : memref<1x96xf32, #tpu.memory_space<vmem>>, vector<1x96xf32>
    %4 = vector.broadcast %3 : vector<1x96xf32> to vector<16x96xf32>
    %5 = arith.addf %2, %4 : vector<16x96xf32>
    %6 = vector.extract_strided_slice %5 {offsets = [0, 0], sizes = [2, 96], strides = [1, 1]} : vector<16x96xf32> to vector<2x96xf32>
    %7 = vector.extract_strided_slice %6 {offsets = [0, 0], sizes = [2, 8], strides = [1, 1]} : vector<2x96xf32> to vector<2x8xf32>
    %8 = vector.extract_strided_slice %6 {offsets = [0, 8], sizes = [2, 8], strides = [1, 1]} : vector<2x96xf32> to vector<2x8xf32>
    %9 = vector.extract_strided_slice %6 {offsets = [0, 16], sizes = [2, 8], strides = [1, 1]} : vector<2x96xf32> to vector<2x8xf32>
    %10 = vector.extract_strided_slice %6 {offsets = [0, 24], sizes = [2, 8], strides = [1, 1]} : vector<2x96xf32> to vector<2x8xf32>
    %11 = tpu.concatenate %7, %8, %9, %10 in 0 : vector<2x8xf32>, vector<2x8xf32>, vector<2x8xf32>, vector<2x8xf32> -> vector<8x8xf32>
    %12 = vector.extract_strided_slice %6 {offsets = [0, 32], sizes = [2, 8], strides = [1, 1]} : vector<2x96xf32> to vector<2x8xf32>
    %13 = vector.extract_strided_slice %6 {offsets = [0, 40], sizes = [2, 8], strides = [1, 1]} : vector<2x96xf32> to vector<2x8xf32>
    %14 = vector.extract_strided_slice %6 {offsets = [0, 48], sizes = [2, 8], strides = [1, 1]} : vector<2x96xf32> to vector<2x8xf32>
    %15 = vector.extract_strided_slice %6 {offsets = [0, 56], sizes = [2, 8], strides = [1, 1]} : vector<2x96xf32> to vector<2x8xf32>
    %16 = tpu.concatenate %12, %13, %14, %15 in 0 : vector<2x8xf32>, vector<2x8xf32>, vector<2x8xf32>, vector<2x8xf32> -> vector<8x8xf32>
    %17 = vector.extract_strided_slice %6 {offsets = [0, 64], sizes = [2, 8], strides = [1, 1]} : vector<2x96xf32> to vector<2x8xf32>
    %18 = vector.extract_strided_slice %6 {offsets = [0, 72], sizes = [2, 8], strides = [1, 1]} : vector<2x96xf32> to vector<2x8xf32>
    %19 = vector.extract_strided_slice %6 {offsets = [0, 80], sizes = [2, 8], strides = [1, 1]} : vector<2x96xf32> to vector<2x8xf32>
    %20 = vector.extract_strided_slice %6 {offsets = [0, 88], sizes = [2, 8], strides = [1, 1]} : vector<2x96xf32> to vector<2x8xf32>
    %21 = tpu.concatenate %17, %18, %19, %20 in 0 : vector<2x8xf32>, vector<2x8xf32>, vector<2x8xf32>, vector<2x8xf32> -> vector<8x8xf32>
    "tpu.trace_start"() <{level = 10 : i32, message = "sd,td->st"}> : () -> ()
    %cst_5 = arith.constant dense<0.000000e+00> : vector<8x8xf32>
    %22 = tpu.matmul %11, %16, %cst_5 {dimension_numbers = #tpu.dot_dimension_numbers<[1], [1], [0], [0], [0, 0, 1, 0], [], []>} : vector<8x8xf32>, vector<8x8xf32>, vector<8x8xf32> -> vector<8x8xf32>
    "tpu.trace_stop"() : () -> ()
    %cst_6 = arith.constant dense<0xFF800000> : vector<8xf32>
    %23 = vector.multi_reduction <maximumf>, %22, %cst_6 [1] : vector<8x8xf32> to vector<8xf32>
    %24 = vector.shape_cast %23 : vector<8xf32> to vector<8x1xf32>
    %25 = vector.broadcast %24 : vector<8x1xf32> to vector<8x8xf32>
    %26 = arith.subf %22, %25 : vector<8x8xf32>
    %27 = math.exp %26 : vector<8x8xf32>
    %cst_7 = arith.constant dense<0.000000e+00> : vector<8xf32>
    %28 = vector.multi_reduction <add>, %27, %cst_7 [1] : vector<8x8xf32> to vector<8xf32>
    %29 = vector.shape_cast %28 : vector<8xf32> to vector<8x1xf32>
    %30 = tpu.reciprocal %29 {approx = true} : vector<8x1xf32> -> vector<8x1xf32>
    %31 = vector.broadcast %30 : vector<8x1xf32> to vector<8x8xf32>
    %32 = arith.mulf %27, %31 : vector<8x8xf32>
    %cst_8 = arith.constant dense<0.000000e+00> : vector<8x8xf32>
    %33 = tpu.matmul %32, %21, %cst_8 {dimension_numbers = #tpu.dot_dimension_numbers<[1], [0], [0], [1], [0, 0, 1, 1], [], []>} : vector<8x8xf32>, vector<8x8xf32>, vector<8x8xf32> -> vector<8x8xf32>
    %34 = vector.extract_strided_slice %33 {offsets = [0, 0], sizes = [2, 8], strides = [1, 1]} : vector<8x8xf32> to vector<2x8xf32>
    %35 = vector.extract_strided_slice %33 {offsets = [2, 0], sizes = [2, 8], strides = [1, 1]} : vector<8x8xf32> to vector<2x8xf32>
    %36 = vector.extract_strided_slice %33 {offsets = [4, 0], sizes = [2, 8], strides = [1, 1]} : vector<8x8xf32> to vector<2x8xf32>
    %37 = vector.extract_strided_slice %33 {offsets = [6, 0], sizes = [2, 8], strides = [1, 1]} : vector<8x8xf32> to vector<2x8xf32>
    %38 = tpu.concatenate %34, %35, %36, %37 in 1 : vector<2x8xf32>, vector<2x8xf32>, vector<2x8xf32>, vector<2x8xf32> -> vector<2x32xf32>
    %39 = vector.extract_strided_slice %5 {offsets = [2, 0], sizes = [2, 96], strides = [1, 1]} : vector<16x96xf32> to vector<2x96xf32>
    %40 = vector.extract_strided_slice %39 {offsets = [0, 0], sizes = [2, 8], strides = [1, 1]} : vector<2x96xf32> to vector<2x8xf32>
    %41 = vector.extract_strided_slice %39 {offsets = [0, 8], sizes = [2, 8], strides = [1, 1]} : vector<2x96xf32> to vector<2x8xf32>
    %42 = vector.extract_strided_slice %39 {offsets = [0, 16], sizes = [2, 8], strides = [1, 1]} : vector<2x96xf32> to vector<2x8xf32>
    %43 = vector.extract_strided_slice %39 {offsets = [0, 24], sizes = [2, 8], strides = [1, 1]} : vector<2x96xf32> to vector<2x8xf32>
    %44 = tpu.concatenate %40, %41, %42, %43 in 0 : vector<2x8xf32>, vector<2x8xf32>, vector<2x8xf32>, vector<2x8xf32> -> vector<8x8xf32>
    %45 = vector.extract_strided_slice %39 {offsets = [0, 32], sizes = [2, 8], strides = [1, 1]} : vector<2x96xf32> to vector<2x8xf32>
    %46 = vector.extract_strided_slice %39 {offsets = [0, 40], sizes = [2, 8], strides = [1, 1]} : vector<2x96xf32> to vector<2x8xf32>
    %47 = vector.extract_strided_slice %39 {offsets = [0, 48], sizes = [2, 8], strides = [1, 1]} : vector<2x96xf32> to vector<2x8xf32>
    %48 = vector.extract_strided_slice %39 {offsets = [0, 56], sizes = [2, 8], strides = [1, 1]} : vector<2x96xf32> to vector<2x8xf32>
    %49 = tpu.concatenate %45, %46, %47, %48 in 0 : vector<2x8xf32>, vector<2x8xf32>, vector<2x8xf32>, vector<2x8xf32> -> vector<8x8xf32>
    %50 = vector.extract_strided_slice %39 {offsets = [0, 64], sizes = [2, 8], strides = [1, 1]} : vector<2x96xf32> to vector<2x8xf32>
    %51 = vector.extract_strided_slice %39 {offsets = [0, 72], sizes = [2, 8], strides = [1, 1]} : vector<2x96xf32> to vector<2x8xf32>
    %52 = vector.extract_strided_slice %39 {offsets = [0, 80], sizes = [2, 8], strides = [1, 1]} : vector<2x96xf32> to vector<2x8xf32>
    %53 = vector.extract_strided_slice %39 {offsets = [0, 88], sizes = [2, 8], strides = [1, 1]} : vector<2x96xf32> to vector<2x8xf32>
    %54 = tpu.concatenate %50, %51, %52, %53 in 0 : vector<2x8xf32>, vector<2x8xf32>, vector<2x8xf32>, vector<2x8xf32> -> vector<8x8xf32>
    "tpu.trace_start"() <{level = 10 : i32, message = "sd,td->st"}> : () -> ()
    %cst_9 = arith.constant dense<0.000000e+00> : vector<8x8xf32>
    %55 = tpu.matmul %44, %49, %cst_9 {dimension_numbers = #tpu.dot_dimension_numbers<[1], [1], [0], [0], [0, 0, 1, 0], [], []>} : vector<8x8xf32>, vector<8x8xf32>, vector<8x8xf32> -> vector<8x8xf32>
    "tpu.trace_stop"() : () -> ()
    %cst_10 = arith.constant dense<0xFF800000> : vector<8xf32>
    %56 = vector.multi_reduction <maximumf>, %55, %cst_10 [1] : vector<8x8xf32> to vector<8xf32>
    %57 = vector.shape_cast %56 : vector<8xf32> to vector<8x1xf32>
    %58 = vector.broadcast %57 : vector<8x1xf32> to vector<8x8xf32>
    %59 = arith.subf %55, %58 : vector<8x8xf32>
    %60 = math.exp %59 : vector<8x8xf32>
    %cst_11 = arith.constant dense<0.000000e+00> : vector<8xf32>
    %61 = vector.multi_reduction <add>, %60, %cst_11 [1] : vector<8x8xf32> to vector<8xf32>
    %62 = vector.shape_cast %61 : vector<8xf32> to vector<8x1xf32>
    %63 = tpu.reciprocal %62 {approx = true} : vector<8x1xf32> -> vector<8x1xf32>
    %64 = vector.broadcast %63 : vector<8x1xf32> to vector<8x8xf32>
    %65 = arith.mulf %60, %64 : vector<8x8xf32>
    %cst_12 = arith.constant dense<0.000000e+00> : vector<8x8xf32>
    %66 = tpu.matmul %65, %54, %cst_12 {dimension_numbers = #tpu.dot_dimension_numbers<[1], [0], [0], [1], [0, 0, 1, 1], [], []>} : vector<8x8xf32>, vector<8x8xf32>, vector<8x8xf32> -> vector<8x8xf32>
    %67 = vector.extract_strided_slice %66 {offsets = [0, 0], sizes = [2, 8], strides = [1, 1]} : vector<8x8xf32> to vector<2x8xf32>
    %68 = vector.extract_strided_slice %66 {offsets = [2, 0], sizes = [2, 8], strides = [1, 1]} : vector<8x8xf32> to vector<2x8xf32>
    %69 = vector.extract_strided_slice %66 {offsets = [4, 0], sizes = [2, 8], strides = [1, 1]} : vector<8x8xf32> to vector<2x8xf32>
    %70 = vector.extract_strided_slice %66 {offsets = [6, 0], sizes = [2, 8], strides = [1, 1]} : vector<8x8xf32> to vector<2x8xf32>
    %71 = tpu.concatenate %67, %68, %69, %70 in 1 : vector<2x8xf32>, vector<2x8xf32>, vector<2x8xf32>, vector<2x8xf32> -> vector<2x32xf32>
    %72 = vector.extract_strided_slice %5 {offsets = [4, 0], sizes = [2, 96], strides = [1, 1]} : vector<16x96xf32> to vector<2x96xf32>
    %73 = vector.extract_strided_slice %72 {offsets = [0, 0], sizes = [2, 8], strides = [1, 1]} : vector<2x96xf32> to vector<2x8xf32>
    %74 = vector.extract_strided_slice %72 {offsets = [0, 8], sizes = [2, 8], strides = [1, 1]} : vector<2x96xf32> to vector<2x8xf32>
    %75 = vector.extract_strided_slice %72 {offsets = [0, 16], sizes = [2, 8], strides = [1, 1]} : vector<2x96xf32> to vector<2x8xf32>
    %76 = vector.extract_strided_slice %72 {offsets = [0, 24], sizes = [2, 8], strides = [1, 1]} : vector<2x96xf32> to vector<2x8xf32>
    %77 = tpu.concatenate %73, %74, %75, %76 in 0 : vector<2x8xf32>, vector<2x8xf32>, vector<2x8xf32>, vector<2x8xf32> -> vector<8x8xf32>
    %78 = vector.extract_strided_slice %72 {offsets = [0, 32], sizes = [2, 8], strides = [1, 1]} : vector<2x96xf32> to vector<2x8xf32>
    %79 = vector.extract_strided_slice %72 {offsets = [0, 40], sizes = [2, 8], strides = [1, 1]} : vector<2x96xf32> to vector<2x8xf32>
    %80 = vector.extract_strided_slice %72 {offsets = [0, 48], sizes = [2, 8], strides = [1, 1]} : vector<2x96xf32> to vector<2x8xf32>
    %81 = vector.extract_strided_slice %72 {offsets = [0, 56], sizes = [2, 8], strides = [1, 1]} : vector<2x96xf32> to vector<2x8xf32>
    %82 = tpu.concatenate %78, %79, %80, %81 in 0 : vector<2x8xf32>, vector<2x8xf32>, vector<2x8xf32>, vector<2x8xf32> -> vector<8x8xf32>
    %83 = vector.extract_strided_slice %72 {offsets = [0, 64], sizes = [2, 8], strides = [1, 1]} : vector<2x96xf32> to vector<2x8xf32>
    %84 = vector.extract_strided_slice %72 {offsets = [0, 72], sizes = [2, 8], strides = [1, 1]} : vector<2x96xf32> to vector<2x8xf32>
    %85 = vector.extract_strided_slice %72 {offsets = [0, 80], sizes = [2, 8], strides = [1, 1]} : vector<2x96xf32> to vector<2x8xf32>
    %86 = vector.extract_strided_slice %72 {offsets = [0, 88], sizes = [2, 8], strides = [1, 1]} : vector<2x96xf32> to vector<2x8xf32>
    %87 = tpu.concatenate %83, %84, %85, %86 in 0 : vector<2x8xf32>, vector<2x8xf32>, vector<2x8xf32>, vector<2x8xf32> -> vector<8x8xf32>
    "tpu.trace_start"() <{level = 10 : i32, message = "sd,td->st"}> : () -> ()
    %cst_13 = arith.constant dense<0.000000e+00> : vector<8x8xf32>
    %88 = tpu.matmul %77, %82, %cst_13 {dimension_numbers = #tpu.dot_dimension_numbers<[1], [1], [0], [0], [0, 0, 1, 0], [], []>} : vector<8x8xf32>, vector<8x8xf32>, vector<8x8xf32> -> vector<8x8xf32>
    "tpu.trace_stop"() : () -> ()
    %cst_14 = arith.constant dense<0xFF800000> : vector<8xf32>
    %89 = vector.multi_reduction <maximumf>, %88, %cst_14 [1] : vector<8x8xf32> to vector<8xf32>
    %90 = vector.shape_cast %89 : vector<8xf32> to vector<8x1xf32>
    %91 = vector.broadcast %90 : vector<8x1xf32> to vector<8x8xf32>
    %92 = arith.subf %88, %91 : vector<8x8xf32>
    %93 = math.exp %92 : vector<8x8xf32>
    %cst_15 = arith.constant dense<0.000000e+00> : vector<8xf32>
    %94 = vector.multi_reduction <add>, %93, %cst_15 [1] : vector<8x8xf32> to vector<8xf32>
    %95 = vector.shape_cast %94 : vector<8xf32> to vector<8x1xf32>
    %96 = tpu.reciprocal %95 {approx = true} : vector<8x1xf32> -> vector<8x1xf32>
    %97 = vector.broadcast %96 : vector<8x1xf32> to vector<8x8xf32>
    %98 = arith.mulf %93, %97 : vector<8x8xf32>
    %cst_16 = arith.constant dense<0.000000e+00> : vector<8x8xf32>
    %99 = tpu.matmul %98, %87, %cst_16 {dimension_numbers = #tpu.dot_dimension_numbers<[1], [0], [0], [1], [0, 0, 1, 1], [], []>} : vector<8x8xf32>, vector<8x8xf32>, vector<8x8xf32> -> vector<8x8xf32>
    %100 = vector.extract_strided_slice %99 {offsets = [0, 0], sizes = [2, 8], strides = [1, 1]} : vector<8x8xf32> to vector<2x8xf32>
    %101 = vector.extract_strided_slice %99 {offsets = [2, 0], sizes = [2, 8], strides = [1, 1]} : vector<8x8xf32> to vector<2x8xf32>
    %102 = vector.extract_strided_slice %99 {offsets = [4, 0], sizes = [2, 8], strides = [1, 1]} : vector<8x8xf32> to vector<2x8xf32>
    %103 = vector.extract_strided_slice %99 {offsets = [6, 0], sizes = [2, 8], strides = [1, 1]} : vector<8x8xf32> to vector<2x8xf32>
    %104 = tpu.concatenate %100, %101, %102, %103 in 1 : vector<2x8xf32>, vector<2x8xf32>, vector<2x8xf32>, vector<2x8xf32> -> vector<2x32xf32>
    %105 = vector.extract_strided_slice %5 {offsets = [6, 0], sizes = [2, 96], strides = [1, 1]} : vector<16x96xf32> to vector<2x96xf32>
    %106 = vector.extract_strided_slice %105 {offsets = [0, 0], sizes = [2, 8], strides = [1, 1]} : vector<2x96xf32> to vector<2x8xf32>
    %107 = vector.extract_strided_slice %105 {offsets = [0, 8], sizes = [2, 8], strides = [1, 1]} : vector<2x96xf32> to vector<2x8xf32>
    %108 = vector.extract_strided_slice %105 {offsets = [0, 16], sizes = [2, 8], strides = [1, 1]} : vector<2x96xf32> to vector<2x8xf32>
    %109 = vector.extract_strided_slice %105 {offsets = [0, 24], sizes = [2, 8], strides = [1, 1]} : vector<2x96xf32> to vector<2x8xf32>
    %110 = tpu.concatenate %106, %107, %108, %109 in 0 : vector<2x8xf32>, vector<2x8xf32>, vector<2x8xf32>, vector<2x8xf32> -> vector<8x8xf32>
    %111 = vector.extract_strided_slice %105 {offsets = [0, 32], sizes = [2, 8], strides = [1, 1]} : vector<2x96xf32> to vector<2x8xf32>
    %112 = vector.extract_strided_slice %105 {offsets = [0, 40], sizes = [2, 8], strides = [1, 1]} : vector<2x96xf32> to vector<2x8xf32>
    %113 = vector.extract_strided_slice %105 {offsets = [0, 48], sizes = [2, 8], strides = [1, 1]} : vector<2x96xf32> to vector<2x8xf32>
    %114 = vector.extract_strided_slice %105 {offsets = [0, 56], sizes = [2, 8], strides = [1, 1]} : vector<2x96xf32> to vector<2x8xf32>
    %115 = tpu.concatenate %111, %112, %113, %114 in 0 : vector<2x8xf32>, vector<2x8xf32>, vector<2x8xf32>, vector<2x8xf32> -> vector<8x8xf32>
    %116 = vector.extract_strided_slice %105 {offsets = [0, 64], sizes = [2, 8], strides = [1, 1]} : vector<2x96xf32> to vector<2x8xf32>
    %117 = vector.extract_strided_slice %105 {offsets = [0, 72], sizes = [2, 8], strides = [1, 1]} : vector<2x96xf32> to vector<2x8xf32>
    %118 = vector.extract_strided_slice %105 {offsets = [0, 80], sizes = [2, 8], strides = [1, 1]} : vector<2x96xf32> to vector<2x8xf32>
    %119 = vector.extract_strided_slice %105 {offsets = [0, 88], sizes = [2, 8], strides = [1, 1]} : vector<2x96xf32> to vector<2x8xf32>
    %120 = tpu.concatenate %116, %117, %118, %119 in 0 : vector<2x8xf32>, vector<2x8xf32>, vector<2x8xf32>, vector<2x8xf32> -> vector<8x8xf32>
    "tpu.trace_start"() <{level = 10 : i32, message = "sd,td->st"}> : () -> ()
    %cst_17 = arith.constant dense<0.000000e+00> : vector<8x8xf32>
    %121 = tpu.matmul %110, %115, %cst_17 {dimension_numbers = #tpu.dot_dimension_numbers<[1], [1], [0], [0], [0, 0, 1, 0], [], []>} : vector<8x8xf32>, vector<8x8xf32>, vector<8x8xf32> -> vector<8x8xf32>
    "tpu.trace_stop"() : () -> ()
    %cst_18 = arith.constant dense<0xFF800000> : vector<8xf32>
    %122 = vector.multi_reduction <maximumf>, %121, %cst_18 [1] : vector<8x8xf32> to vector<8xf32>
    %123 = vector.shape_cast %122 : vector<8xf32> to vector<8x1xf32>
    %124 = vector.broadcast %123 : vector<8x1xf32> to vector<8x8xf32>
    %125 = arith.subf %121, %124 : vector<8x8xf32>
    %126 = math.exp %125 : vector<8x8xf32>
    %cst_19 = arith.constant dense<0.000000e+00> : vector<8xf32>
    %127 = vector.multi_reduction <add>, %126, %cst_19 [1] : vector<8x8xf32> to vector<8xf32>
    %128 = vector.shape_cast %127 : vector<8xf32> to vector<8x1xf32>
    %129 = tpu.reciprocal %128 {approx = true} : vector<8x1xf32> -> vector<8x1xf32>
    %130 = vector.broadcast %129 : vector<8x1xf32> to vector<8x8xf32>
    %131 = arith.mulf %126, %130 : vector<8x8xf32>
    %cst_20 = arith.constant dense<0.000000e+00> : vector<8x8xf32>
    %132 = tpu.matmul %131, %120, %cst_20 {dimension_numbers = #tpu.dot_dimension_numbers<[1], [0], [0], [1], [0, 0, 1, 1], [], []>} : vector<8x8xf32>, vector<8x8xf32>, vector<8x8xf32> -> vector<8x8xf32>
    %133 = vector.extract_strided_slice %132 {offsets = [0, 0], sizes = [2, 8], strides = [1, 1]} : vector<8x8xf32> to vector<2x8xf32>
    %134 = vector.extract_strided_slice %132 {offsets = [2, 0], sizes = [2, 8], strides = [1, 1]} : vector<8x8xf32> to vector<2x8xf32>
    %135 = vector.extract_strided_slice %132 {offsets = [4, 0], sizes = [2, 8], strides = [1, 1]} : vector<8x8xf32> to vector<2x8xf32>
    %136 = vector.extract_strided_slice %132 {offsets = [6, 0], sizes = [2, 8], strides = [1, 1]} : vector<8x8xf32> to vector<2x8xf32>
    %137 = tpu.concatenate %133, %134, %135, %136 in 1 : vector<2x8xf32>, vector<2x8xf32>, vector<2x8xf32>, vector<2x8xf32> -> vector<2x32xf32>
    %138 = vector.extract_strided_slice %5 {offsets = [8, 0], sizes = [2, 96], strides = [1, 1]} : vector<16x96xf32> to vector<2x96xf32>
    %139 = vector.extract_strided_slice %138 {offsets = [0, 0], sizes = [2, 8], strides = [1, 1]} : vector<2x96xf32> to vector<2x8xf32>
    %140 = vector.extract_strided_slice %138 {offsets = [0, 8], sizes = [2, 8], strides = [1, 1]} : vector<2x96xf32> to vector<2x8xf32>
    %141 = vector.extract_strided_slice %138 {offsets = [0, 16], sizes = [2, 8], strides = [1, 1]} : vector<2x96xf32> to vector<2x8xf32>
    %142 = vector.extract_strided_slice %138 {offsets = [0, 24], sizes = [2, 8], strides = [1, 1]} : vector<2x96xf32> to vector<2x8xf32>
    %143 = tpu.concatenate %139, %140, %141, %142 in 0 : vector<2x8xf32>, vector<2x8xf32>, vector<2x8xf32>, vector<2x8xf32> -> vector<8x8xf32>
    %144 = vector.extract_strided_slice %138 {offsets = [0, 32], sizes = [2, 8], strides = [1, 1]} : vector<2x96xf32> to vector<2x8xf32>
    %145 = vector.extract_strided_slice %138 {offsets = [0, 40], sizes = [2, 8], strides = [1, 1]} : vector<2x96xf32> to vector<2x8xf32>
    %146 = vector.extract_strided_slice %138 {offsets = [0, 48], sizes = [2, 8], strides = [1, 1]} : vector<2x96xf32> to vector<2x8xf32>
    %147 = vector.extract_strided_slice %138 {offsets = [0, 56], sizes = [2, 8], strides = [1, 1]} : vector<2x96xf32> to vector<2x8xf32>
    %148 = tpu.concatenate %144, %145, %146, %147 in 0 : vector<2x8xf32>, vector<2x8xf32>, vector<2x8xf32>, vector<2x8xf32> -> vector<8x8xf32>
    %149 = vector.extract_strided_slice %138 {offsets = [0, 64], sizes = [2, 8], strides = [1, 1]} : vector<2x96xf32> to vector<2x8xf32>
    %150 = vector.extract_strided_slice %138 {offsets = [0, 72], sizes = [2, 8], strides = [1, 1]} : vector<2x96xf32> to vector<2x8xf32>
    %151 = vector.extract_strided_slice %138 {offsets = [0, 80], sizes = [2, 8], strides = [1, 1]} : vector<2x96xf32> to vector<2x8xf32>
    %152 = vector.extract_strided_slice %138 {offsets = [0, 88], sizes = [2, 8], strides = [1, 1]} : vector<2x96xf32> to vector<2x8xf32>
    %153 = tpu.concatenate %149, %150, %151, %152 in 0 : vector<2x8xf32>, vector<2x8xf32>, vector<2x8xf32>, vector<2x8xf32> -> vector<8x8xf32>
    "tpu.trace_start"() <{level = 10 : i32, message = "sd,td->st"}> : () -> ()
    %cst_21 = arith.constant dense<0.000000e+00> : vector<8x8xf32>
    %154 = tpu.matmul %143, %148, %cst_21 {dimension_numbers = #tpu.dot_dimension_numbers<[1], [1], [0], [0], [0, 0, 1, 0], [], []>} : vector<8x8xf32>, vector<8x8xf32>, vector<8x8xf32> -> vector<8x8xf32>
    "tpu.trace_stop"() : () -> ()
    %cst_22 = arith.constant dense<0xFF800000> : vector<8xf32>
    %155 = vector.multi_reduction <maximumf>, %154, %cst_22 [1] : vector<8x8xf32> to vector<8xf32>
    %156 = vector.shape_cast %155 : vector<8xf32> to vector<8x1xf32>
    %157 = vector.broadcast %156 : vector<8x1xf32> to vector<8x8xf32>
    %158 = arith.subf %154, %157 : vector<8x8xf32>
    %159 = math.exp %158 : vector<8x8xf32>
    %cst_23 = arith.constant dense<0.000000e+00> : vector<8xf32>
    %160 = vector.multi_reduction <add>, %159, %cst_23 [1] : vector<8x8xf32> to vector<8xf32>
    %161 = vector.shape_cast %160 : vector<8xf32> to vector<8x1xf32>
    %162 = tpu.reciprocal %161 {approx = true} : vector<8x1xf32> -> vector<8x1xf32>
    %163 = vector.broadcast %162 : vector<8x1xf32> to vector<8x8xf32>
    %164 = arith.mulf %159, %163 : vector<8x8xf32>
    %cst_24 = arith.constant dense<0.000000e+00> : vector<8x8xf32>
    %165 = tpu.matmul %164, %153, %cst_24 {dimension_numbers = #tpu.dot_dimension_numbers<[1], [0], [0], [1], [0, 0, 1, 1], [], []>} : vector<8x8xf32>, vector<8x8xf32>, vector<8x8xf32> -> vector<8x8xf32>
    %166 = vector.extract_strided_slice %165 {offsets = [0, 0], sizes = [2, 8], strides = [1, 1]} : vector<8x8xf32> to vector<2x8xf32>
    %167 = vector.extract_strided_slice %165 {offsets = [2, 0], sizes = [2, 8], strides = [1, 1]} : vector<8x8xf32> to vector<2x8xf32>
    %168 = vector.extract_strided_slice %165 {offsets = [4, 0], sizes = [2, 8], strides = [1, 1]} : vector<8x8xf32> to vector<2x8xf32>
    %169 = vector.extract_strided_slice %165 {offsets = [6, 0], sizes = [2, 8], strides = [1, 1]} : vector<8x8xf32> to vector<2x8xf32>
    %170 = tpu.concatenate %166, %167, %168, %169 in 1 : vector<2x8xf32>, vector<2x8xf32>, vector<2x8xf32>, vector<2x8xf32> -> vector<2x32xf32>
    %171 = vector.extract_strided_slice %5 {offsets = [10, 0], sizes = [2, 96], strides = [1, 1]} : vector<16x96xf32> to vector<2x96xf32>
    %172 = vector.extract_strided_slice %171 {offsets = [0, 0], sizes = [2, 8], strides = [1, 1]} : vector<2x96xf32> to vector<2x8xf32>
    %173 = vector.extract_strided_slice %171 {offsets = [0, 8], sizes = [2, 8], strides = [1, 1]} : vector<2x96xf32> to vector<2x8xf32>
    %174 = vector.extract_strided_slice %171 {offsets = [0, 16], sizes = [2, 8], strides = [1, 1]} : vector<2x96xf32> to vector<2x8xf32>
    %175 = vector.extract_strided_slice %171 {offsets = [0, 24], sizes = [2, 8], strides = [1, 1]} : vector<2x96xf32> to vector<2x8xf32>
    %176 = tpu.concatenate %172, %173, %174, %175 in 0 : vector<2x8xf32>, vector<2x8xf32>, vector<2x8xf32>, vector<2x8xf32> -> vector<8x8xf32>
    %177 = vector.extract_strided_slice %171 {offsets = [0, 32], sizes = [2, 8], strides = [1, 1]} : vector<2x96xf32> to vector<2x8xf32>
    %178 = vector.extract_strided_slice %171 {offsets = [0, 40], sizes = [2, 8], strides = [1, 1]} : vector<2x96xf32> to vector<2x8xf32>
    %179 = vector.extract_strided_slice %171 {offsets = [0, 48], sizes = [2, 8], strides = [1, 1]} : vector<2x96xf32> to vector<2x8xf32>
    %180 = vector.extract_strided_slice %171 {offsets = [0, 56], sizes = [2, 8], strides = [1, 1]} : vector<2x96xf32> to vector<2x8xf32>
    %181 = tpu.concatenate %177, %178, %179, %180 in 0 : vector<2x8xf32>, vector<2x8xf32>, vector<2x8xf32>, vector<2x8xf32> -> vector<8x8xf32>
    %182 = vector.extract_strided_slice %171 {offsets = [0, 64], sizes = [2, 8], strides = [1, 1]} : vector<2x96xf32> to vector<2x8xf32>
    %183 = vector.extract_strided_slice %171 {offsets = [0, 72], sizes = [2, 8], strides = [1, 1]} : vector<2x96xf32> to vector<2x8xf32>
    %184 = vector.extract_strided_slice %171 {offsets = [0, 80], sizes = [2, 8], strides = [1, 1]} : vector<2x96xf32> to vector<2x8xf32>
    %185 = vector.extract_strided_slice %171 {offsets = [0, 88], sizes = [2, 8], strides = [1, 1]} : vector<2x96xf32> to vector<2x8xf32>
    %186 = tpu.concatenate %182, %183, %184, %185 in 0 : vector<2x8xf32>, vector<2x8xf32>, vector<2x8xf32>, vector<2x8xf32> -> vector<8x8xf32>
    "tpu.trace_start"() <{level = 10 : i32, message = "sd,td->st"}> : () -> ()
    %cst_25 = arith.constant dense<0.000000e+00> : vector<8x8xf32>
    %187 = tpu.matmul %176, %181, %cst_25 {dimension_numbers = #tpu.dot_dimension_numbers<[1], [1], [0], [0], [0, 0, 1, 0], [], []>} : vector<8x8xf32>, vector<8x8xf32>, vector<8x8xf32> -> vector<8x8xf32>
    "tpu.trace_stop"() : () -> ()
    %cst_26 = arith.constant dense<0xFF800000> : vector<8xf32>
    %188 = vector.multi_reduction <maximumf>, %187, %cst_26 [1] : vector<8x8xf32> to vector<8xf32>
    %189 = vector.shape_cast %188 : vector<8xf32> to vector<8x1xf32>
    %190 = vector.broadcast %189 : vector<8x1xf32> to vector<8x8xf32>
    %191 = arith.subf %187, %190 : vector<8x8xf32>
    %192 = math.exp %191 : vector<8x8xf32>
    %cst_27 = arith.constant dense<0.000000e+00> : vector<8xf32>
    %193 = vector.multi_reduction <add>, %192, %cst_27 [1] : vector<8x8xf32> to vector<8xf32>
    %194 = vector.shape_cast %193 : vector<8xf32> to vector<8x1xf32>
    %195 = tpu.reciprocal %194 {approx = true} : vector<8x1xf32> -> vector<8x1xf32>
    %196 = vector.broadcast %195 : vector<8x1xf32> to vector<8x8xf32>
    %197 = arith.mulf %192, %196 : vector<8x8xf32>
    %cst_28 = arith.constant dense<0.000000e+00> : vector<8x8xf32>
    %198 = tpu.matmul %197, %186, %cst_28 {dimension_numbers = #tpu.dot_dimension_numbers<[1], [0], [0], [1], [0, 0, 1, 1], [], []>} : vector<8x8xf32>, vector<8x8xf32>, vector<8x8xf32> -> vector<8x8xf32>
    %199 = vector.extract_strided_slice %198 {offsets = [0, 0], sizes = [2, 8], strides = [1, 1]} : vector<8x8xf32> to vector<2x8xf32>
    %200 = vector.extract_strided_slice %198 {offsets = [2, 0], sizes = [2, 8], strides = [1, 1]} : vector<8x8xf32> to vector<2x8xf32>
    %201 = vector.extract_strided_slice %198 {offsets = [4, 0], sizes = [2, 8], strides = [1, 1]} : vector<8x8xf32> to vector<2x8xf32>
    %202 = vector.extract_strided_slice %198 {offsets = [6, 0], sizes = [2, 8], strides = [1, 1]} : vector<8x8xf32> to vector<2x8xf32>
    %203 = tpu.concatenate %199, %200, %201, %202 in 1 : vector<2x8xf32>, vector<2x8xf32>, vector<2x8xf32>, vector<2x8xf32> -> vector<2x32xf32>
    %204 = vector.extract_strided_slice %5 {offsets = [12, 0], sizes = [2, 96], strides = [1, 1]} : vector<16x96xf32> to vector<2x96xf32>
    %205 = vector.extract_strided_slice %204 {offsets = [0, 0], sizes = [2, 8], strides = [1, 1]} : vector<2x96xf32> to vector<2x8xf32>
    %206 = vector.extract_strided_slice %204 {offsets = [0, 8], sizes = [2, 8], strides = [1, 1]} : vector<2x96xf32> to vector<2x8xf32>
    %207 = vector.extract_strided_slice %204 {offsets = [0, 16], sizes = [2, 8], strides = [1, 1]} : vector<2x96xf32> to vector<2x8xf32>
    %208 = vector.extract_strided_slice %204 {offsets = [0, 24], sizes = [2, 8], strides = [1, 1]} : vector<2x96xf32> to vector<2x8xf32>
    %209 = tpu.concatenate %205, %206, %207, %208 in 0 : vector<2x8xf32>, vector<2x8xf32>, vector<2x8xf32>, vector<2x8xf32> -> vector<8x8xf32>
    %210 = vector.extract_strided_slice %204 {offsets = [0, 32], sizes = [2, 8], strides = [1, 1]} : vector<2x96xf32> to vector<2x8xf32>
    %211 = vector.extract_strided_slice %204 {offsets = [0, 40], sizes = [2, 8], strides = [1, 1]} : vector<2x96xf32> to vector<2x8xf32>
    %212 = vector.extract_strided_slice %204 {offsets = [0, 48], sizes = [2, 8], strides = [1, 1]} : vector<2x96xf32> to vector<2x8xf32>
    %213 = vector.extract_strided_slice %204 {offsets = [0, 56], sizes = [2, 8], strides = [1, 1]} : vector<2x96xf32> to vector<2x8xf32>
    %214 = tpu.concatenate %210, %211, %212, %213 in 0 : vector<2x8xf32>, vector<2x8xf32>, vector<2x8xf32>, vector<2x8xf32> -> vector<8x8xf32>
    %215 = vector.extract_strided_slice %204 {offsets = [0, 64], sizes = [2, 8], strides = [1, 1]} : vector<2x96xf32> to vector<2x8xf32>
    %216 = vector.extract_strided_slice %204 {offsets = [0, 72], sizes = [2, 8], strides = [1, 1]} : vector<2x96xf32> to vector<2x8xf32>
    %217 = vector.extract_strided_slice %204 {offsets = [0, 80], sizes = [2, 8], strides = [1, 1]} : vector<2x96xf32> to vector<2x8xf32>
    %218 = vector.extract_strided_slice %204 {offsets = [0, 88], sizes = [2, 8], strides = [1, 1]} : vector<2x96xf32> to vector<2x8xf32>
    %219 = tpu.concatenate %215, %216, %217, %218 in 0 : vector<2x8xf32>, vector<2x8xf32>, vector<2x8xf32>, vector<2x8xf32> -> vector<8x8xf32>
    "tpu.trace_start"() <{level = 10 : i32, message = "sd,td->st"}> : () -> ()
    %cst_29 = arith.constant dense<0.000000e+00> : vector<8x8xf32>
    %220 = tpu.matmul %209, %214, %cst_29 {dimension_numbers = #tpu.dot_dimension_numbers<[1], [1], [0], [0], [0, 0, 1, 0], [], []>} : vector<8x8xf32>, vector<8x8xf32>, vector<8x8xf32> -> vector<8x8xf32>
    "tpu.trace_stop"() : () -> ()
    %cst_30 = arith.constant dense<0xFF800000> : vector<8xf32>
    %221 = vector.multi_reduction <maximumf>, %220, %cst_30 [1] : vector<8x8xf32> to vector<8xf32>
    %222 = vector.shape_cast %221 : vector<8xf32> to vector<8x1xf32>
    %223 = vector.broadcast %222 : vector<8x1xf32> to vector<8x8xf32>
    %224 = arith.subf %220, %223 : vector<8x8xf32>
    %225 = math.exp %224 : vector<8x8xf32>
    %cst_31 = arith.constant dense<0.000000e+00> : vector<8xf32>
    %226 = vector.multi_reduction <add>, %225, %cst_31 [1] : vector<8x8xf32> to vector<8xf32>
    %227 = vector.shape_cast %226 : vector<8xf32> to vector<8x1xf32>
    %228 = tpu.reciprocal %227 {approx = true} : vector<8x1xf32> -> vector<8x1xf32>
    %229 = vector.broadcast %228 : vector<8x1xf32> to vector<8x8xf32>
    %230 = arith.mulf %225, %229 : vector<8x8xf32>
    %cst_32 = arith.constant dense<0.000000e+00> : vector<8x8xf32>
    %231 = tpu.matmul %230, %219, %cst_32 {dimension_numbers = #tpu.dot_dimension_numbers<[1], [0], [0], [1], [0, 0, 1, 1], [], []>} : vector<8x8xf32>, vector<8x8xf32>, vector<8x8xf32> -> vector<8x8xf32>
    %232 = vector.extract_strided_slice %231 {offsets = [0, 0], sizes = [2, 8], strides = [1, 1]} : vector<8x8xf32> to vector<2x8xf32>
    %233 = vector.extract_strided_slice %231 {offsets = [2, 0], sizes = [2, 8], strides = [1, 1]} : vector<8x8xf32> to vector<2x8xf32>
    %234 = vector.extract_strided_slice %231 {offsets = [4, 0], sizes = [2, 8], strides = [1, 1]} : vector<8x8xf32> to vector<2x8xf32>
    %235 = vector.extract_strided_slice %231 {offsets = [6, 0], sizes = [2, 8], strides = [1, 1]} : vector<8x8xf32> to vector<2x8xf32>
    %236 = tpu.concatenate %232, %233, %234, %235 in 1 : vector<2x8xf32>, vector<2x8xf32>, vector<2x8xf32>, vector<2x8xf32> -> vector<2x32xf32>
    %237 = vector.extract_strided_slice %5 {offsets = [14, 0], sizes = [2, 96], strides = [1, 1]} : vector<16x96xf32> to vector<2x96xf32>
    %238 = vector.extract_strided_slice %237 {offsets = [0, 0], sizes = [2, 8], strides = [1, 1]} : vector<2x96xf32> to vector<2x8xf32>
    %239 = vector.extract_strided_slice %237 {offsets = [0, 8], sizes = [2, 8], strides = [1, 1]} : vector<2x96xf32> to vector<2x8xf32>
    %240 = vector.extract_strided_slice %237 {offsets = [0, 16], sizes = [2, 8], strides = [1, 1]} : vector<2x96xf32> to vector<2x8xf32>
    %241 = vector.extract_strided_slice %237 {offsets = [0, 24], sizes = [2, 8], strides = [1, 1]} : vector<2x96xf32> to vector<2x8xf32>
    %242 = tpu.concatenate %238, %239, %240, %241 in 0 : vector<2x8xf32>, vector<2x8xf32>, vector<2x8xf32>, vector<2x8xf32> -> vector<8x8xf32>
    %243 = vector.extract_strided_slice %237 {offsets = [0, 32], sizes = [2, 8], strides = [1, 1]} : vector<2x96xf32> to vector<2x8xf32>
    %244 = vector.extract_strided_slice %237 {offsets = [0, 40], sizes = [2, 8], strides = [1, 1]} : vector<2x96xf32> to vector<2x8xf32>
    %245 = vector.extract_strided_slice %237 {offsets = [0, 48], sizes = [2, 8], strides = [1, 1]} : vector<2x96xf32> to vector<2x8xf32>
    %246 = vector.extract_strided_slice %237 {offsets = [0, 56], sizes = [2, 8], strides = [1, 1]} : vector<2x96xf32> to vector<2x8xf32>
    %247 = tpu.concatenate %243, %244, %245, %246 in 0 : vector<2x8xf32>, vector<2x8xf32>, vector<2x8xf32>, vector<2x8xf32> -> vector<8x8xf32>
    %248 = vector.extract_strided_slice %237 {offsets = [0, 64], sizes = [2, 8], strides = [1, 1]} : vector<2x96xf32> to vector<2x8xf32>
    %249 = vector.extract_strided_slice %237 {offsets = [0, 72], sizes = [2, 8], strides = [1, 1]} : vector<2x96xf32> to vector<2x8xf32>
    %250 = vector.extract_strided_slice %237 {offsets = [0, 80], sizes = [2, 8], strides = [1, 1]} : vector<2x96xf32> to vector<2x8xf32>
    %251 = vector.extract_strided_slice %237 {offsets = [0, 88], sizes = [2, 8], strides = [1, 1]} : vector<2x96xf32> to vector<2x8xf32>
    %252 = tpu.concatenate %248, %249, %250, %251 in 0 : vector<2x8xf32>, vector<2x8xf32>, vector<2x8xf32>, vector<2x8xf32> -> vector<8x8xf32>
    "tpu.trace_start"() <{level = 10 : i32, message = "sd,td->st"}> : () -> ()
    %cst_33 = arith.constant dense<0.000000e+00> : vector<8x8xf32>
    %253 = tpu.matmul %242, %247, %cst_33 {dimension_numbers = #tpu.dot_dimension_numbers<[1], [1], [0], [0], [0, 0, 1, 0], [], []>} : vector<8x8xf32>, vector<8x8xf32>, vector<8x8xf32> -> vector<8x8xf32>
    "tpu.trace_stop"() : () -> ()
    %cst_34 = arith.constant dense<0xFF800000> : vector<8xf32>
    %254 = vector.multi_reduction <maximumf>, %253, %cst_34 [1] : vector<8x8xf32> to vector<8xf32>
    %255 = vector.shape_cast %254 : vector<8xf32> to vector<8x1xf32>
    %256 = vector.broadcast %255 : vector<8x1xf32> to vector<8x8xf32>
    %257 = arith.subf %253, %256 : vector<8x8xf32>
    %258 = math.exp %257 : vector<8x8xf32>
    %cst_35 = arith.constant dense<0.000000e+00> : vector<8xf32>
    %259 = vector.multi_reduction <add>, %258, %cst_35 [1] : vector<8x8xf32> to vector<8xf32>
    %260 = vector.shape_cast %259 : vector<8xf32> to vector<8x1xf32>
    %261 = tpu.reciprocal %260 {approx = true} : vector<8x1xf32> -> vector<8x1xf32>
    %262 = vector.broadcast %261 : vector<8x1xf32> to vector<8x8xf32>
    %263 = arith.mulf %258, %262 : vector<8x8xf32>
    %cst_36 = arith.constant dense<0.000000e+00> : vector<8x8xf32>
    %264 = tpu.matmul %263, %252, %cst_36 {dimension_numbers = #tpu.dot_dimension_numbers<[1], [0], [0], [1], [0, 0, 1, 1], [], []>} : vector<8x8xf32>, vector<8x8xf32>, vector<8x8xf32> -> vector<8x8xf32>
    %265 = vector.extract_strided_slice %264 {offsets = [0, 0], sizes = [2, 8], strides = [1, 1]} : vector<8x8xf32> to vector<2x8xf32>
    %266 = vector.extract_strided_slice %264 {offsets = [2, 0], sizes = [2, 8], strides = [1, 1]} : vector<8x8xf32> to vector<2x8xf32>
    %267 = vector.extract_strided_slice %264 {offsets = [4, 0], sizes = [2, 8], strides = [1, 1]} : vector<8x8xf32> to vector<2x8xf32>
    %268 = vector.extract_strided_slice %264 {offsets = [6, 0], sizes = [2, 8], strides = [1, 1]} : vector<8x8xf32> to vector<2x8xf32>
    %269 = tpu.concatenate %265, %266, %267, %268 in 1 : vector<2x8xf32>, vector<2x8xf32>, vector<2x8xf32>, vector<2x8xf32> -> vector<2x32xf32>
    %270 = tpu.concatenate %38, %71, %104, %137, %170, %203, %236, %269 in 0 : vector<2x32xf32>, vector<2x32xf32>, vector<2x32xf32>, vector<2x32xf32>, vector<2x32xf32>, vector<2x32xf32>, vector<2x32xf32>, vector<2x32xf32> -> vector<16x32xf32>
    %c0_37 = arith.constant 0 : index
    %c0_38 = arith.constant 0 : index
    %271 = vector.load %arg3[%c0_37, %c0_38] : memref<16x32xf32, #tpu.memory_space<vmem>>, vector<16x32xf32>
    tpu.vector_store %arg3[%c0_37, %c0_38], %270 {strides = array<i32>} : memref<16x32xf32, #tpu.memory_space<vmem>>, vector<16x32xf32>,
    return
  }
}

</mosaic_0001>

<llo_original>
// kernel: tpu_custom_call.1
$region0: #{tpu_custom_call.1}
  #allocation0 [shape = 'u32[]', space=smem, size = 0x4, offset = 0x4, fixed_abs, tag = 'smem constant byte address 0x4 - core index']
  #allocation1 [shape = 'u32[144,128]{1,0:T(1,128)}', space=vmem, size = 0x12000, scoped, tag = 'internal scratch']
  %s0 = inlined_call_operand.hbm [shape: f32[16,32], index: 0, kind: input, shape index: {}]
  %s1 = inlined_call_operand.hbm [shape: f32[32,96], index: 1, kind: input, shape index: {}]
  %s2 = inlined_call_operand.vmem [shape: f32[1,96], index: 2, kind: input, shape index: {}]
  %s3 = inlined_call_operand.hbm [shape: f32[16,32], index: 3, kind: output, shape index: {}]
  %s4 = sld [smem:[#allocation0]]
  $region30: #{tpu_custom_call.1} parent=0
    _
  %s6 = ssub.s32 1, %s4
  %s7 = scalar_select 0, %s6, %s4
  $region1: #{tpu_custom_call.1} parent=0
    #allocation2 [shape = 'u8[8192]{0}', space=vmem, size = 0x2000, scoped, tag = 'input window, operand 0, single buffered']
    #allocation3 [shape = 's32[1]{0}', space=sflag, size = 0x4, scoped, tag = 'scoped memory for tpu_custom_call.1']
    #allocation4 [shape = 's32[1]{0}', space=sflag, size = 0x4, scoped, tag = 'scoped memory for tpu_custom_call.1']
    #allocation5 [shape = 'u8[16384]{0}', space=vmem, size = 0x4000, scoped, tag = 'input window, operand 1, single buffered']
    #allocation6 [shape = 's32[1]{0}', space=sflag, size = 0x4, scoped, tag = 'scoped memory for tpu_custom_call.1']
    #allocation7 [shape = 'u8[8192]{0}', space=vmem, size = 0x2000, scoped, tag = 'output window, operand 0, single buffered']
    %8 = vsyncpa [#allocation3], 0
    %9 = vsyncpa [#allocation6], 0
    %10 = vsyncpa [#allocation4], 0
    // Predicated region
    $region2: #{tpu_custom_call.1} parent=1 // pred_check
      _
    $region3: #{tpu_custom_call.1} parent=1 // pred_check_branch
      %12 = sbr.rel (0) target = $region5
    $region4: #{tpu_custom_call.1} parent=1 // pred_region
      %s14 = ssub.s32 256, 256
      %15 = vsyncadd [#allocation3], %s14
      %s16 = sshll.u32 [#allocation2], 4
      %s17 = int_to_ptr.vmem [resolvable:$true] %s16
      %22 = dma.hbm_to_vmem [thread:$0]  %s0, 256, %s17, [#allocation3], 128, 128, 8
    $region5: #{tpu_custom_call.1} parent=1 // pred_fallthru
      _
    // Predicated region
    $region6: #{tpu_custom_call.1} parent=1 // pred_check
      _
    $region7: #{tpu_custom_call.1} parent=1 // pred_check_branch
      %24 = sbr.rel (0) target = $region9
    $region8: #{tpu_custom_call.1} parent=1 // pred_region
      %s26 = ssub.s32 512, 512
      %27 = vsyncadd [#allocation6], %s26
      %s28 = sshll.u32 [#allocation5], 4
      %s29 = int_to_ptr.vmem [resolvable:$true] %s28
      %34 = dma.hbm_to_vmem [thread:$0]  %s1, 512, %s29, [#allocation6], 128, 128, 8
    $region9: #{tpu_custom_call.1} parent=1 // pred_fallthru
      _
    // Predicated region
    $region10: #{tpu_custom_call.1} parent=1 // pred_check
      _
    $region11: #{tpu_custom_call.1} parent=1 // pred_check_branch
      %36 = sbr.rel (0) target = $region13
    $region12: #{tpu_custom_call.1} parent=1 // pred_region
      _
    $region13: #{tpu_custom_call.1} parent=1 // pred_fallthru
      _
    // Predicated region
    $region14: #{tpu_custom_call.1} parent=1 // pred_check
      _
    $region15: #{tpu_custom_call.1} parent=1 // pred_check_branch
      %38 = sbr.rel (0) target = $region17
    $region16: #{tpu_custom_call.1} parent=1 // pred_region
      %39 = dma.done [#allocation3], 256
    $region17: #{tpu_custom_call.1} parent=1 // pred_fallthru
      _
    // Predicated region
    $region18: #{tpu_custom_call.1} parent=1 // pred_check
      _
    $region19: #{tpu_custom_call.1} parent=1 // pred_check_branch
      %41 = sbr.rel (0) target = $region21
    $region20: #{tpu_custom_call.1} parent=1 // pred_region
      %42 = dma.done [#allocation6], 512
    $region21: #{tpu_custom_call.1} parent=1 // pred_fallthru
      _
    %v43 = vld [vmem:[#allocation2] sm:$0xff]
    %v44 = vld [vmem:[#allocation2 + $0x8] sm:$0xff]
    %v45 = vld [vmem:[#allocation5] sm:$0xff]
    %v46 = vld [vmem:[#allocation5 + $0x8] sm:$0xff]
    %v47 = vld [vmem:[#allocation5 + $0x10] sm:$0xff]
    %v48 = vld [vmem:[#allocation5 + $0x18] sm:$0xff]
    %v49 = vld [vmem:[%s2] sm:$0x1]
    %v51 = vlaneseq
    %v52 = vshrl.u32 %v51, 7
    %v53 = vsub.s32 0, %v52
    %v54 = vrot.slane %v49, %v53
    %vm56 = vcmask 261120
    %v58 = vsel %vm56, %v43, 0
    %v61 = vsel %vm56, %v44, 0
    %63 = vmatprep.subr.mxu0 0.0
    %64 = vmatpush1.msra.mxu0 %v45
    %65 = vmatprep.subr.mxu0 0.0
    %66 = vmatpush1.msra.mxu0 %v46
    %67 = vmatprep.subr.mxu0 0.0
    %68 = vmatpush1.msra.mxu0 %v47
    %69 = vmatprep.subr.mxu0 0.0
    %70 = vmatpush1.msra.mxu0 %v48
    %71 = vmatprep.subr.mxu0 0.0
    %72 = vmatpush1.msra.mxu0 0.0
    %73 = vmatprep.subr.mxu0 0.0
    %74 = vmatpush1.msra.mxu0 0.0
    %75 = vmatprep.subr.mxu0 0.0
    %76 = vmatpush1.msra.mxu0 0.0
    %77 = vmatprep.subr.mxu0 0.0
    %78 = vmatpush1.msra.mxu0 0.0
    %79 = vmatprep.subr.mxu0 0.0
    %80 = vmatpush1.msra.mxu0 0.0
    %81 = vmatprep.subr.mxu0 0.0
    %82 = vmatpush1.msra.mxu0 0.0
    %83 = vmatprep.subr.mxu0 0.0
    %84 = vmatpush1.msra.mxu0 0.0
    %85 = vmatprep.subr.mxu0 0.0
    %86 = vmatpush1.msra.mxu0 0.0
    %87 = vmatprep.subr.mxu0 0.0
    %88 = vmatpush1.msra.mxu0 0.0
    %89 = vmatprep.subr.mxu0 0.0
    %90 = vmatpush1.msra.mxu0 0.0
    %91 = vmatprep.subr.mxu0 0.0
    %92 = vmatpush1.msra.mxu0 0.0
    %93 = vmatprep.subr.mxu0 0.0
    %94 = vmatpush1.msra.mxu0 0.0
    %95 = vmatprep.subr.mxu0 0.0
    %96 = vmatpush1.msra.mxu0 0.0
    %97 = vmatprep.subr.mxu0 0.0
    %98 = vmatpush1.msra.mxu0 0.0
    %99 = vmatprep.subr.mxu0 0.0
    %100 = vmatpush1.msra.mxu0 0.0
    %101 = vmatprep.subr.mxu0 0.0
    %102 = vmatpush1.msra.mxu0 0.0
    %103 = vmatprep.subr.mxu0 0.0
    %104 = vmatpush1.msra.mxu0 0.0
    %105 = vmatprep.subr.mxu0 0.0
    %106 = vmatpush1.msra.mxu0 0.0
    %107 = vmatprep.subr.mxu0 0.0
    %108 = vmatpush1.msra.mxu0 0.0
    %109 = vmatprep.subr.mxu0 0.0
    %110 = vmatpush1.msra.mxu0 0.0
    %111 = vmatprep.subr.mxu0 0.0
    %112 = vmatpush1.msra.mxu0 0.0
    %113 = vmatprep.subr.mxu0 0.0
    %114 = vmatpush1.msra.mxu0 0.0
    %115 = vmatprep.subr.mxu0 0.0
    %116 = vmatpush1.msra.mxu0 0.0
    %117 = vmatprep.subr.mxu0 0.0
    %118 = vmatpush1.msra.mxu0 0.0
    %119 = vmatprep.subr.mxu0 0.0
    %120 = vmatpush1.msra.mxu0 0.0
    %121 = vmatprep.subr.mxu0 0.0
    %122 = vmatpush1.msra.mxu0 0.0
    %123 = vmatprep.subr.mxu0 0.0
    %124 = vmatpush1.msra.mxu0 0.0
    %125 = vmatprep.subr.mxu0 0.0
    %126 = vmatpush1.msra.mxu0 0.0
    %127 = vmatprep.mubr.f32.mxu0 0.0
    %128 = vmatmul.mubr.f32.gmra.mrb[0].mxu0 %v58
    %v129 = vpop.f32.mrb[0].mxu0
    %v130 = vadd.f32 %v54, %v129
    %v131 = vpop.f32.mrb[0].mxu0
    %132 = vmatprep.mubr.f32.mxu0 0.0
    %133 = vmatmul.mubr.f32.gmra.mrb[0].mxu0 %v61
    %v134 = vpop.f32.mrb[0].mxu0
    %v135 = vadd.f32 %v54, %v134
    %v136 = vpop.f32.mrb[0].mxu0
    %137 = vdwg.mxu0
    %v139 = vrot.slane %v130, 6
    %140 = vrot.lane.b32.xlu0 %v139, 120
    %v141 = vpop.permute.xlu0 %140
    %v143 = vrot.slane %v130, 4
    %144 = vrot.lane.b32.xlu0 %v143, 112
    %v145 = vpop.permute.xlu0 %144
    %v147 = vrot.slane %v130, 2
    %148 = vrot.lane.b32.xlu0 %v147, 104
    %v149 = vpop.permute.xlu0 %148
    %vm151 = vcmask 1041408
    %v152 = vsel %vm151, %v130, %v141
    %vm153 = vcmask 1043456
    %v154 = vsel %vm153, %v152, %v145
    %vm155 = vcmask 1045504
    %v156 = vsel %vm155, %v154, %v149
    %158 = vrot.lane.b32.xlu0 %v156, 96
    %v159 = vpop.permute.xlu0 %158
    %vm160 = vcmask 64512
    %v161 = vsel %vm160, %v156, 0
    %v163 = vsel %vm160, %v159, 0
    %165 = vmatprep.subr.mxu0 0.0
    %166 = vmatpush1.xpose.msra.mxu0 %v163
    %167 = vmatprep.subr.mxu0 0.0
    %168 = vmatpush1.xpose.msra.mxu0 0.0
    %169 = vmatprep.subr.mxu0 0.0
    %170 = vmatpush1.xpose.msra.mxu0 0.0
    %171 = vmatprep.subr.mxu0 0.0
    %172 = vmatpush1.xpose.msra.mxu0 0.0
    %173 = vmatprep.subr.mxu0 0.0
    %174 = vmatpush1.xpose.msra.mxu0 0.0
    %175 = vmatprep.subr.mxu0 0.0
    %176 = vmatpush1.xpose.msra.mxu0 0.0
    %177 = vmatprep.subr.mxu0 0.0
    %178 = vmatpush1.xpose.msra.mxu0 0.0
    %179 = vmatprep.subr.mxu0 0.0
    %180 = vmatpush1.xpose.msra.mxu0 0.0
    %181 = vmatprep.subr.mxu0 0.0
    %182 = vmatpush1.xpose.msra.mxu0 0.0
    %183 = vmatprep.subr.mxu0 0.0
    %184 = vmatpush1.xpose.msra.mxu0 0.0
    %185 = vmatprep.subr.mxu0 0.0
    %186 = vmatpush1.xpose.msra.mxu0 0.0
    %187 = vmatprep.subr.mxu0 0.0
    %188 = vmatpush1.xpose.msra.mxu0 0.0
    %189 = vmatprep.subr.mxu0 0.0
    %190 = vmatpush1.xpose.msra.mxu0 0.0
    %191 = vmatprep.subr.mxu0 0.0
    %192 = vmatpush1.xpose.msra.mxu0 0.0
    %193 = vmatprep.subr.mxu0 0.0
    %194 = vmatpush1.xpose.msra.mxu0 0.0
    %195 = vmatprep.subr.mxu0 0.0
    %196 = vmatpush1.xpose.msra.mxu0 0.0
    %197 = vmatprep.subr.mxu0 0.0
    %198 = vmatpush1.xpose.msra.mxu0 0.0
    %199 = vmatprep.subr.mxu0 0.0
    %200 = vmatpush1.xpose.msra.mxu0 0.0
    %201 = vmatprep.subr.mxu0 0.0
    %202 = vmatpush1.xpose.msra.mxu0 0.0
    %203 = vmatprep.subr.mxu0 0.0
    %204 = vmatpush1.xpose.msra.mxu0 0.0
    %205 = vmatprep.subr.mxu0 0.0
    %206 = vmatpush1.xpose.msra.mxu0 0.0
    %207 = vmatprep.subr.mxu0 0.0
    %208 = vmatpush1.xpose.msra.mxu0 0.0
    %209 = vmatprep.subr.mxu0 0.0
    %210 = vmatpush1.xpose.msra.mxu0 0.0
    %211 = vmatprep.subr.mxu0 0.0
    %212 = vmatpush1.xpose.msra.mxu0 0.0
    %213 = vmatprep.subr.mxu0 0.0
    %214 = vmatpush1.xpose.msra.mxu0 0.0
    %215 = vmatprep.subr.mxu0 0.0
    %216 = vmatpush1.xpose.msra.mxu0 0.0
    %217 = vmatprep.subr.mxu0 0.0
    %218 = vmatpush1.xpose.msra.mxu0 0.0
    %219 = vmatprep.subr.mxu0 0.0
    %220 = vmatpush1.xpose.msra.mxu0 0.0
    %221 = vmatprep.subr.mxu0 0.0
    %222 = vmatpush1.xpose.msra.mxu0 0.0
    %223 = vmatprep.subr.mxu0 0.0
    %224 = vmatpush1.xpose.msra.mxu0 0.0
    %225 = vmatprep.subr.mxu0 0.0
    %226 = vmatpush1.xpose.msra.mxu0 0.0
    %227 = vmatprep.subr.mxu0 0.0
    %228 = vmatpush1.xpose.msra.mxu0 0.0
    %229 = vmatprep.mubr.f32.mxu0 0.0
    %230 = vmatmul.mubr.f32.gmra.mrb[0].mxu0 %v161
    %v231 = vpop.f32.mrb[0].mxu0
    %v232 = vadd.f32 0.0, %v231
    %v233 = vpop.f32.mrb[0].mxu0
    %234 = vdwg.mxu0
    %v235 = vsel %vm160, %v232, -inf
    %236 = vmax.xlane.f32.xlu0 %v235
    %v237 = vpop.xlane.xlu0 %236
    %v238 = vsub.f32 %v232, %v237
    %v239 = vmul.f32 %v238, 1.442695
    %v240 = vpow.pop %v239
    %v241 = vsel %vm160, %v240, 0.0
    %242 = vadd.xlane.f32.xlu0 %v241
    %v243 = vpop.xlane.xlu0 %242
    %v244 = vrcp.pop %v243
    %v245 = vmul.f32 %v240, %v244
    %246 = vrot.lane.b32.xlu0 %v156, 64
    %v247 = vpop.permute.xlu0 %246
    %v250 = vsel %vm160, %v245, 0
    %252 = vmatprep.subr.mxu0 0.0
    %253 = vmatpush1.msra.mxu0 %v247
    %254 = vmatprep.subr.mxu0 0.0
    %255 = vmatpush1.msra.mxu0 0.0
    %256 = vmatprep.subr.mxu0 0.0
    %257 = vmatpush1.msra.mxu0 0.0
    %258 = vmatprep.subr.mxu0 0.0
    %259 = vmatpush1.msra.mxu0 0.0
    %260 = vmatprep.subr.mxu0 0.0
    %261 = vmatpush1.msra.mxu0 0.0
    %262 = vmatprep.subr.mxu0 0.0
    %263 = vmatpush1.msra.mxu0 0.0
    %264 = vmatprep.subr.mxu0 0.0
    %265 = vmatpush1.msra.mxu0 0.0
    %266 = vmatprep.subr.mxu0 0.0
    %267 = vmatpush1.msra.mxu0 0.0
    %268 = vmatprep.subr.mxu0 0.0
    %269 = vmatpush1.msra.mxu0 0.0
    %270 = vmatprep.subr.mxu0 0.0
    %271 = vmatpush1.msra.mxu0 0.0
    %272 = vmatprep.subr.mxu0 0.0
    %273 = vmatpush1.msra.mxu0 0.0
    %274 = vmatprep.subr.mxu0 0.0
    %275 = vmatpush1.msra.mxu0 0.0
    %276 = vmatprep.subr.mxu0 0.0
    %277 = vmatpush1.msra.mxu0 0.0
    %278 = vmatprep.subr.mxu0 0.0
    %279 = vmatpush1.msra.mxu0 0.0
    %280 = vmatprep.subr.mxu0 0.0
    %281 = vmatpush1.msra.mxu0 0.0
    %282 = vmatprep.subr.mxu0 0.0
    %283 = vmatpush1.msra.mxu0 0.0
    %284 = vmatprep.subr.mxu0 0.0
    %285 = vmatpush1.msra.mxu0 0.0
    %286 = vmatprep.subr.mxu0 0.0
    %287 = vmatpush1.msra.mxu0 0.0
    %288 = vmatprep.subr.mxu0 0.0
    %289 = vmatpush1.msra.mxu0 0.0
    %290 = vmatprep.subr.mxu0 0.0
    %291 = vmatpush1.msra.mxu0 0.0
    %292 = vmatprep.subr.mxu0 0.0
    %293 = vmatpush1.msra.mxu0 0.0
    %294 = vmatprep.subr.mxu0 0.0
    %295 = vmatpush1.msra.mxu0 0.0
    %296 = vmatprep.subr.mxu0 0.0
    %297 = vmatpush1.msra.mxu0 0.0
    %298 = vmatprep.subr.mxu0 0.0
    %299 = vmatpush1.msra.mxu0 0.0
    %300 = vmatprep.subr.mxu0 0.0
    %301 = vmatpush1.msra.mxu0 0.0
    %302 = vmatprep.subr.mxu0 0.0
    %303 = vmatpush1.msra.mxu0 0.0
    %304 = vmatprep.subr.mxu0 0.0
    %305 = vmatpush1.msra.mxu0 0.0
    %306 = vmatprep.subr.mxu0 0.0
    %307 = vmatpush1.msra.mxu0 0.0
    %308 = vmatprep.subr.mxu0 0.0
    %309 = vmatpush1.msra.mxu0 0.0
    %310 = vmatprep.subr.mxu0 0.0
    %311 = vmatpush1.msra.mxu0 0.0
    %312 = vmatprep.subr.mxu0 0.0
    %313 = vmatpush1.msra.mxu0 0.0
    %314 = vmatprep.subr.mxu0 0.0
    %315 = vmatpush1.msra.mxu0 0.0
    %316 = vmatprep.mubr.f32.mxu0 0.0
    %317 = vmatmul.mubr.f32.gmra.mrb[0].mxu0 %v250
    %v318 = vpop.f32.mrb[0].mxu0
    %v319 = vadd.f32 0.0, %v318
    %v320 = vpop.f32.mrb[0].mxu0
    %321 = vdwg.mxu0
    %v323 = vrot.slane %v319, 2
    %324 = vrot.lane.b32.xlu0 %v323, 8
    %v325 = vpop.permute.xlu0 %324
    %v327 = vrot.slane %v319, 4
    %328 = vrot.lane.b32.xlu0 %v327, 16
    %v329 = vpop.permute.xlu0 %328
    %v331 = vrot.slane %v319, 6
    %332 = vrot.lane.b32.xlu0 %v331, 24
    %v333 = vpop.permute.xlu0 %332
    %v335 = vsel %vm160, %v319, %v325
    %vm336 = vcmask 130048
    %v337 = vsel %vm336, %v335, %v329
    %vm338 = vcmask 195584
    %v339 = vsel %vm338, %v337, %v333
    %341 = vrot.lane.b32.xlu0 %v130, 120
    %v342 = vpop.permute.xlu0 %341
    %344 = vrot.lane.b32.xlu0 %v139, 112
    %v345 = vpop.permute.xlu0 %344
    %347 = vrot.lane.b32.xlu0 %v143, 104
    %v348 = vpop.permute.xlu0 %347
    %v350 = vsel %vm151, %v147, %v342
    %v351 = vsel %vm153, %v350, %v345
    %v352 = vsel %vm155, %v351, %v348
    %354 = vrot.lane.b32.xlu0 %v352, 96
    %v355 = vpop.permute.xlu0 %354
    %v356 = vsel %vm160, %v352, 0
    %v358 = vsel %vm160, %v355, 0
    %360 = vmatprep.subr.mxu0 0.0
    %361 = vmatpush1.xpose.msra.mxu0 %v358
    %362 = vmatprep.subr.mxu0 0.0
    %363 = vmatpush1.xpose.msra.mxu0 0.0
    %364 = vmatprep.subr.mxu0 0.0
    %365 = vmatpush1.xpose.msra.mxu0 0.0
    %366 = vmatprep.subr.mxu0 0.0
    %367 = vmatpush1.xpose.msra.mxu0 0.0
    %368 = vmatprep.subr.mxu0 0.0
    %369 = vmatpush1.xpose.msra.mxu0 0.0
    %370 = vmatprep.subr.mxu0 0.0
    %371 = vmatpush1.xpose.msra.mxu0 0.0
    %372 = vmatprep.subr.mxu0 0.0
    %373 = vmatpush1.xpose.msra.mxu0 0.0
    %374 = vmatprep.subr.mxu0 0.0
    %375 = vmatpush1.xpose.msra.mxu0 0.0
    %376 = vmatprep.subr.mxu0 0.0
    %377 = vmatpush1.xpose.msra.mxu0 0.0
    %378 = vmatprep.subr.mxu0 0.0
    %379 = vmatpush1.xpose.msra.mxu0 0.0
    %380 = vmatprep.subr.mxu0 0.0
    %381 = vmatpush1.xpose.msra.mxu0 0.0
    %382 = vmatprep.subr.mxu0 0.0
    %383 = vmatpush1.xpose.msra.mxu0 0.0
    %384 = vmatprep.subr.mxu0 0.0
    %385 = vmatpush1.xpose.msra.mxu0 0.0
    %386 = vmatprep.subr.mxu0 0.0
    %387 = vmatpush1.xpose.msra.mxu0 0.0
    %388 = vmatprep.subr.mxu0 0.0
    %389 = vmatpush1.xpose.msra.mxu0 0.0
    %390 = vmatprep.subr.mxu0 0.0
    %391 = vmatpush1.xpose.msra.mxu0 0.0
    %392 = vmatprep.subr.mxu0 0.0
    %393 = vmatpush1.xpose.msra.mxu0 0.0
    %394 = vmatprep.subr.mxu0 0.0
    %395 = vmatpush1.xpose.msra.mxu0 0.0
    %396 = vmatprep.subr.mxu0 0.0
    %397 = vmatpush1.xpose.msra.mxu0 0.0
    %398 = vmatprep.subr.mxu0 0.0
    %399 = vmatpush1.xpose.msra.mxu0 0.0
    %400 = vmatprep.subr.mxu0 0.0
    %401 = vmatpush1.xpose.msra.mxu0 0.0
    %402 = vmatprep.subr.mxu0 0.0
    %403 = vmatpush1.xpose.msra.mxu0 0.0
    %404 = vmatprep.subr.mxu0 0.0
    %405 = vmatpush1.xpose.msra.mxu0 0.0
    %406 = vmatprep.subr.mxu0 0.0
    %407 = vmatpush1.xpose.msra.mxu0 0.0
    %408 = vmatprep.subr.mxu0 0.0
    %409 = vmatpush1.xpose.msra.mxu0 0.0
    %410 = vmatprep.subr.mxu0 0.0
    %411 = vmatpush1.xpose.msra.mxu0 0.0
    %412 = vmatprep.subr.mxu0 0.0
    %413 = vmatpush1.xpose.msra.mxu0 0.0
    %414 = vmatprep.subr.mxu0 0.0
    %415 = vmatpush1.xpose.msra.mxu0 0.0
    %416 = vmatprep.subr.mxu0 0.0
    %417 = vmatpush1.xpose.msra.mxu0 0.0
    %418 = vmatprep.subr.mxu0 0.0
    %419 = vmatpush1.xpose.msra.mxu0 0.0
    %420 = vmatprep.subr.mxu0 0.0
    %421 = vmatpush1.xpose.msra.mxu0 0.0
    %422 = vmatprep.subr.mxu0 0.0
    %423 = vmatpush1.xpose.msra.mxu0 0.0
    %424 = vmatprep.mubr.f32.mxu0 0.0
    %425 = vmatmul.mubr.f32.gmra.mrb[0].mxu0 %v356
    %v426 = vpop.f32.mrb[0].mxu0
    %v427 = vadd.f32 0.0, %v426
    %v428 = vpop.f32.mrb[0].mxu0
    %429 = vdwg.mxu0
    %v430 = vsel %vm160, %v427, -inf
    %431 = vmax.xlane.f32.xlu0 %v430
    %v432 = vpop.xlane.xlu0 %431
    %v433 = vsub.f32 %v427, %v432
    %v434 = vmul.f32 %v433, 1.442695
    %v435 = vpow.pop %v434
    %v436 = vsel %vm160, %v435, 0.0
    %437 = vadd.xlane.f32.xlu0 %v436
    %v438 = vpop.xlane.xlu0 %437
    %v439 = vrcp.pop %v438
    %v440 = vmul.f32 %v435, %v439
    %441 = vrot.lane.b32.xlu0 %v352, 64
    %v442 = vpop.permute.xlu0 %441
    %v445 = vsel %vm160, %v440, 0
    %447 = vmatprep.subr.mxu0 0.0
    %448 = vmatpush1.msra.mxu0 %v442
    %449 = vmatprep.subr.mxu0 0.0
    %450 = vmatpush1.msra.mxu0 0.0
    %451 = vmatprep.subr.mxu0 0.0
    %452 = vmatpush1.msra.mxu0 0.0
    %453 = vmatprep.subr.mxu0 0.0
    %454 = vmatpush1.msra.mxu0 0.0
    %455 = vmatprep.subr.mxu0 0.0
    %456 = vmatpush1.msra.mxu0 0.0
    %457 = vmatprep.subr.mxu0 0.0
    %458 = vmatpush1.msra.mxu0 0.0
    %459 = vmatprep.subr.mxu0 0.0
    %460 = vmatpush1.msra.mxu0 0.0
    %461 = vmatprep.subr.mxu0 0.0
    %462 = vmatpush1.msra.mxu0 0.0
    %463 = vmatprep.subr.mxu0 0.0
    %464 = vmatpush1.msra.mxu0 0.0
    %465 = vmatprep.subr.mxu0 0.0
    %466 = vmatpush1.msra.mxu0 0.0
    %467 = vmatprep.subr.mxu0 0.0
    %468 = vmatpush1.msra.mxu0 0.0
    %469 = vmatprep.subr.mxu0 0.0
    %470 = vmatpush1.msra.mxu0 0.0
    %471 = vmatprep.subr.mxu0 0.0
    %472 = vmatpush1.msra.mxu0 0.0
    %473 = vmatprep.subr.mxu0 0.0
    %474 = vmatpush1.msra.mxu0 0.0
    %475 = vmatprep.subr.mxu0 0.0
    %476 = vmatpush1.msra.mxu0 0.0
    %477 = vmatprep.subr.mxu0 0.0
    %478 = vmatpush1.msra.mxu0 0.0
    %479 = vmatprep.subr.mxu0 0.0
    %480 = vmatpush1.msra.mxu0 0.0
    %481 = vmatprep.subr.mxu0 0.0
    %482 = vmatpush1.msra.mxu0 0.0
    %483 = vmatprep.subr.mxu0 0.0
    %484 = vmatpush1.msra.mxu0 0.0
    %485 = vmatprep.subr.mxu0 0.0
    %486 = vmatpush1.msra.mxu0 0.0
    %487 = vmatprep.subr.mxu0 0.0
    %488 = vmatpush1.msra.mxu0 0.0
    %489 = vmatprep.subr.mxu0 0.0
    %490 = vmatpush1.msra.mxu0 0.0
    %491 = vmatprep.subr.mxu0 0.0
    %492 = vmatpush1.msra.mxu0 0.0
    %493 = vmatprep.subr.mxu0 0.0
    %494 = vmatpush1.msra.mxu0 0.0
    %495 = vmatprep.subr.mxu0 0.0
    %496 = vmatpush1.msra.mxu0 0.0
    %497 = vmatprep.subr.mxu0 0.0
    %498 = vmatpush1.msra.mxu0 0.0
    %499 = vmatprep.subr.mxu0 0.0
    %500 = vmatpush1.msra.mxu0 0.0
    %501 = vmatprep.subr.mxu0 0.0
    %502 = vmatpush1.msra.mxu0 0.0
    %503 = vmatprep.subr.mxu0 0.0
    %504 = vmatpush1.msra.mxu0 0.0
    %505 = vmatprep.subr.mxu0 0.0
    %506 = vmatpush1.msra.mxu0 0.0
    %507 = vmatprep.subr.mxu0 0.0
    %508 = vmatpush1.msra.mxu0 0.0
    %509 = vmatprep.subr.mxu0 0.0
    %510 = vmatpush1.msra.mxu0 0.0
    %511 = vmatprep.mubr.f32.mxu0 0.0
    %512 = vmatmul.mubr.f32.gmra.mrb[0].mxu0 %v445
    %v513 = vpop.f32.mrb[0].mxu0
    %v514 = vadd.f32 0.0, %v513
    %v515 = vpop.f32.mrb[0].mxu0
    %516 = vdwg.mxu0
    %v518 = vrot.slane %v514, 2
    %519 = vrot.lane.b32.xlu0 %v518, 8
    %v520 = vpop.permute.xlu0 %519
    %v522 = vrot.slane %v514, 4
    %523 = vrot.lane.b32.xlu0 %v522, 16
    %v524 = vpop.permute.xlu0 %523
    %v526 = vrot.slane %v514, 6
    %527 = vrot.lane.b32.xlu0 %v526, 24
    %v528 = vpop.permute.xlu0 %527
    %v530 = vsel %vm160, %v514, %v520
    %v531 = vsel %vm336, %v530, %v524
    %v532 = vsel %vm338, %v531, %v528
    %534 = vrot.lane.b32.xlu0 %v147, 120
    %v535 = vpop.permute.xlu0 %534
    %537 = vrot.lane.b32.xlu0 %v130, 112
    %v538 = vpop.permute.xlu0 %537
    %540 = vrot.lane.b32.xlu0 %v139, 104
    %v541 = vpop.permute.xlu0 %540
    %v543 = vsel %vm151, %v143, %v535
    %v544 = vsel %vm153, %v543, %v538
    %v545 = vsel %vm155, %v544, %v541
    %547 = vrot.lane.b32.xlu0 %v545, 96
    %v548 = vpop.permute.xlu0 %547
    %v549 = vsel %vm160, %v545, 0
    %v551 = vsel %vm160, %v548, 0
    %553 = vmatprep.subr.mxu0 0.0
    %554 = vmatpush1.xpose.msra.mxu0 %v551
    %555 = vmatprep.subr.mxu0 0.0
    %556 = vmatpush1.xpose.msra.mxu0 0.0
    %557 = vmatprep.subr.mxu0 0.0
    %558 = vmatpush1.xpose.msra.mxu0 0.0
    %559 = vmatprep.subr.mxu0 0.0
    %560 = vmatpush1.xpose.msra.mxu0 0.0
    %561 = vmatprep.subr.mxu0 0.0
    %562 = vmatpush1.xpose.msra.mxu0 0.0
    %563 = vmatprep.subr.mxu0 0.0
    %564 = vmatpush1.xpose.msra.mxu0 0.0
    %565 = vmatprep.subr.mxu0 0.0
    %566 = vmatpush1.xpose.msra.mxu0 0.0
    %567 = vmatprep.subr.mxu0 0.0
    %568 = vmatpush1.xpose.msra.mxu0 0.0
    %569 = vmatprep.subr.mxu0 0.0
    %570 = vmatpush1.xpose.msra.mxu0 0.0
    %571 = vmatprep.subr.mxu0 0.0
    %572 = vmatpush1.xpose.msra.mxu0 0.0
    %573 = vmatprep.subr.mxu0 0.0
    %574 = vmatpush1.xpose.msra.mxu0 0.0
    %575 = vmatprep.subr.mxu0 0.0
    %576 = vmatpush1.xpose.msra.mxu0 0.0
    %577 = vmatprep.subr.mxu0 0.0
    %578 = vmatpush1.xpose.msra.mxu0 0.0
    %579 = vmatprep.subr.mxu0 0.0
    %580 = vmatpush1.xpose.msra.mxu0 0.0
    %581 = vmatprep.subr.mxu0 0.0
    %582 = vmatpush1.xpose.msra.mxu0 0.0
    %583 = vmatprep.subr.mxu0 0.0
    %584 = vmatpush1.xpose.msra.mxu0 0.0
    %585 = vmatprep.subr.mxu0 0.0
    %586 = vmatpush1.xpose.msra.mxu0 0.0
    %587 = vmatprep.subr.mxu0 0.0
    %588 = vmatpush1.xpose.msra.mxu0 0.0
    %589 = vmatprep.subr.mxu0 0.0
    %590 = vmatpush1.xpose.msra.mxu0 0.0
    %591 = vmatprep.subr.mxu0 0.0
    %592 = vmatpush1.xpose.msra.mxu0 0.0
    %593 = vmatprep.subr.mxu0 0.0
    %594 = vmatpush1.xpose.msra.mxu0 0.0
    %595 = vmatprep.subr.mxu0 0.0
    %596 = vmatpush1.xpose.msra.mxu0 0.0
    %597 = vmatprep.subr.mxu0 0.0
    %598 = vmatpush1.xpose.msra.mxu0 0.0
    %599 = vmatprep.subr.mxu0 0.0
    %600 = vmatpush1.xpose.msra.mxu0 0.0
    %601 = vmatprep.subr.mxu0 0.0
    %602 = vmatpush1.xpose.msra.mxu0 0.0
    %603 = vmatprep.subr.mxu0 0.0
    %604 = vmatpush1.xpose.msra.mxu0 0.0
    %605 = vmatprep.subr.mxu0 0.0
    %606 = vmatpush1.xpose.msra.mxu0 0.0
    %607 = vmatprep.subr.mxu0 0.0
    %608 = vmatpush1.xpose.msra.mxu0 0.0
    %609 = vmatprep.subr.mxu0 0.0
    %610 = vmatpush1.xpose.msra.mxu0 0.0
    %611 = vmatprep.subr.mxu0 0.0
    %612 = vmatpush1.xpose.msra.mxu0 0.0
    %613 = vmatprep.subr.mxu0 0.0
    %614 = vmatpush1.xpose.msra.mxu0 0.0
    %615 = vmatprep.subr.mxu0 0.0
    %616 = vmatpush1.xpose.msra.mxu0 0.0
    %617 = vmatprep.mubr.f32.mxu0 0.0
    %618 = vmatmul.mubr.f32.gmra.mrb[0].mxu0 %v549
    %v619 = vpop.f32.mrb[0].mxu0
    %v620 = vadd.f32 0.0, %v619
    %v621 = vpop.f32.mrb[0].mxu0
    %622 = vdwg.mxu0
    %v623 = vsel %vm160, %v620, -inf
    %624 = vmax.xlane.f32.xlu0 %v623
    %v625 = vpop.xlane.xlu0 %624
    %v626 = vsub.f32 %v620, %v625
    %v627 = vmul.f32 %v626, 1.442695
    %v628 = vpow.pop %v627
    %v629 = vsel %vm160, %v628, 0.0
    %630 = vadd.xlane.f32.xlu0 %v629
    %v631 = vpop.xlane.xlu0 %630
    %v632 = vrcp.pop %v631
    %v633 = vmul.f32 %v628, %v632
    %634 = vrot.lane.b32.xlu0 %v545, 64
    %v635 = vpop.permute.xlu0 %634
    %v638 = vsel %vm160, %v633, 0
    %640 = vmatprep.subr.mxu0 0.0
    %641 = vmatpush1.msra.mxu0 %v635
    %642 = vmatprep.subr.mxu0 0.0
    %643 = vmatpush1.msra.mxu0 0.0
    %644 = vmatprep.subr.mxu0 0.0
    %645 = vmatpush1.msra.mxu0 0.0
    %646 = vmatprep.subr.mxu0 0.0
    %647 = vmatpush1.msra.mxu0 0.0
    %648 = vmatprep.subr.mxu0 0.0
    %649 = vmatpush1.msra.mxu0 0.0
    %650 = vmatprep.subr.mxu0 0.0
    %651 = vmatpush1.msra.mxu0 0.0
    %652 = vmatprep.subr.mxu0 0.0
    %653 = vmatpush1.msra.mxu0 0.0
    %654 = vmatprep.subr.mxu0 0.0
    %655 = vmatpush1.msra.mxu0 0.0
    %656 = vmatprep.subr.mxu0 0.0
    %657 = vmatpush1.msra.mxu0 0.0
    %658 = vmatprep.subr.mxu0 0.0
    %659 = vmatpush1.msra.mxu0 0.0
    %660 = vmatprep.subr.mxu0 0.0
    %661 = vmatpush1.msra.mxu0 0.0
    %662 = vmatprep.subr.mxu0 0.0
    %663 = vmatpush1.msra.mxu0 0.0
    %664 = vmatprep.subr.mxu0 0.0
    %665 = vmatpush1.msra.mxu0 0.0
    %666 = vmatprep.subr.mxu0 0.0
    %667 = vmatpush1.msra.mxu0 0.0
    %668 = vmatprep.subr.mxu0 0.0
    %669 = vmatpush1.msra.mxu0 0.0
    %670 = vmatprep.subr.mxu0 0.0
    %671 = vmatpush1.msra.mxu0 0.0
    %672 = vmatprep.subr.mxu0 0.0
    %673 = vmatpush1.msra.mxu0 0.0
    %674 = vmatprep.subr.mxu0 0.0
    %675 = vmatpush1.msra.mxu0 0.0
    %676 = vmatprep.subr.mxu0 0.0
    %677 = vmatpush1.msra.mxu0 0.0
    %678 = vmatprep.subr.mxu0 0.0
    %679 = vmatpush1.msra.mxu0 0.0
    %680 = vmatprep.subr.mxu0 0.0
    %681 = vmatpush1.msra.mxu0 0.0
    %682 = vmatprep.subr.mxu0 0.0
    %683 = vmatpush1.msra.mxu0 0.0
    %684 = vmatprep.subr.mxu0 0.0
    %685 = vmatpush1.msra.mxu0 0.0
    %686 = vmatprep.subr.mxu0 0.0
    %687 = vmatpush1.msra.mxu0 0.0
    %688 = vmatprep.subr.mxu0 0.0
    %689 = vmatpush1.msra.mxu0 0.0
    %690 = vmatprep.subr.mxu0 0.0
    %691 = vmatpush1.msra.mxu0 0.0
    %692 = vmatprep.subr.mxu0 0.0
    %693 = vmatpush1.msra.mxu0 0.0
    %694 = vmatprep.subr.mxu0 0.0
    %695 = vmatpush1.msra.mxu0 0.0
    %696 = vmatprep.subr.mxu0 0.0
    %697 = vmatpush1.msra.mxu0 0.0
    %698 = vmatprep.subr.mxu0 0.0
    %699 = vmatpush1.msra.mxu0 0.0
    %700 = vmatprep.subr.mxu0 0.0
    %701 = vmatpush1.msra.mxu0 0.0
    %702 = vmatprep.subr.mxu0 0.0
    %703 = vmatpush1.msra.mxu0 0.0
    %704 = vmatprep.mubr.f32.mxu0 0.0
    %705 = vmatmul.mubr.f32.gmra.mrb[0].mxu0 %v638
    %v706 = vpop.f32.mrb[0].mxu0
    %v707 = vadd.f32 0.0, %v706
    %v708 = vpop.f32.mrb[0].mxu0
    %709 = vdwg.mxu0
    %v711 = vrot.slane %v707, 2
    %712 = vrot.lane.b32.xlu0 %v711, 8
    %v713 = vpop.permute.xlu0 %712
    %v715 = vrot.slane %v707, 4
    %716 = vrot.lane.b32.xlu0 %v715, 16
    %v717 = vpop.permute.xlu0 %716
    %v719 = vrot.slane %v707, 6
    %720 = vrot.lane.b32.xlu0 %v719, 24
    %v721 = vpop.permute.xlu0 %720
    %v723 = vsel %vm160, %v707, %v713
    %v724 = vsel %vm336, %v723, %v717
    %v725 = vsel %vm338, %v724, %v721
    %727 = vrot.lane.b32.xlu0 %v143, 120
    %v728 = vpop.permute.xlu0 %727
    %730 = vrot.lane.b32.xlu0 %v147, 112
    %v731 = vpop.permute.xlu0 %730
    %733 = vrot.lane.b32.xlu0 %v130, 104
    %v734 = vpop.permute.xlu0 %733
    %v736 = vsel %vm151, %v139, %v728
    %v737 = vsel %vm153, %v736, %v731
    %v738 = vsel %vm155, %v737, %v734
    %740 = vrot.lane.b32.xlu0 %v738, 96
    %v741 = vpop.permute.xlu0 %740
    %v742 = vsel %vm160, %v738, 0
    %v744 = vsel %vm160, %v741, 0
    %746 = vmatprep.subr.mxu0 0.0
    %747 = vmatpush1.xpose.msra.mxu0 %v744
    %748 = vmatprep.subr.mxu0 0.0
    %749 = vmatpush1.xpose.msra.mxu0 0.0
    %750 = vmatprep.subr.mxu0 0.0
    %751 = vmatpush1.xpose.msra.mxu0 0.0
    %752 = vmatprep.subr.mxu0 0.0
    %753 = vmatpush1.xpose.msra.mxu0 0.0
    %754 = vmatprep.subr.mxu0 0.0
    %755 = vmatpush1.xpose.msra.mxu0 0.0
    %756 = vmatprep.subr.mxu0 0.0
    %757 = vmatpush1.xpose.msra.mxu0 0.0
    %758 = vmatprep.subr.mxu0 0.0
    %759 = vmatpush1.xpose.msra.mxu0 0.0
    %760 = vmatprep.subr.mxu0 0.0
    %761 = vmatpush1.xpose.msra.mxu0 0.0
    %762 = vmatprep.subr.mxu0 0.0
    %763 = vmatpush1.xpose.msra.mxu0 0.0
    %764 = vmatprep.subr.mxu0 0.0
    %765 = vmatpush1.xpose.msra.mxu0 0.0
    %766 = vmatprep.subr.mxu0 0.0
    %767 = vmatpush1.xpose.msra.mxu0 0.0
    %768 = vmatprep.subr.mxu0 0.0
    %769 = vmatpush1.xpose.msra.mxu0 0.0
    %770 = vmatprep.subr.mxu0 0.0
    %771 = vmatpush1.xpose.msra.mxu0 0.0
    %772 = vmatprep.subr.mxu0 0.0
    %773 = vmatpush1.xpose.msra.mxu0 0.0
    %774 = vmatprep.subr.mxu0 0.0
    %775 = vmatpush1.xpose.msra.mxu0 0.0
    %776 = vmatprep.subr.mxu0 0.0
    %777 = vmatpush1.xpose.msra.mxu0 0.0
    %778 = vmatprep.subr.mxu0 0.0
    %779 = vmatpush1.xpose.msra.mxu0 0.0
    %780 = vmatprep.subr.mxu0 0.0
    %781 = vmatpush1.xpose.msra.mxu0 0.0
    %782 = vmatprep.subr.mxu0 0.0
    %783 = vmatpush1.xpose.msra.mxu0 0.0
    %784 = vmatprep.subr.mxu0 0.0
    %785 = vmatpush1.xpose.msra.mxu0 0.0
    %786 = vmatprep.subr.mxu0 0.0
    %787 = vmatpush1.xpose.msra.mxu0 0.0
    %788 = vmatprep.subr.mxu0 0.0
    %789 = vmatpush1.xpose.msra.mxu0 0.0
    %790 = vmatprep.subr.mxu0 0.0
    %791 = vmatpush1.xpose.msra.mxu0 0.0
    %792 = vmatprep.subr.mxu0 0.0
    %793 = vmatpush1.xpose.msra.mxu0 0.0
    %794 = vmatprep.subr.mxu0 0.0
    %795 = vmatpush1.xpose.msra.mxu0 0.0
    %796 = vmatprep.subr.mxu0 0.0
    %797 = vmatpush1.xpose.msra.mxu0 0.0
    %798 = vmatprep.subr.mxu0 0.0
    %799 = vmatpush1.xpose.msra.mxu0 0.0
    %800 = vmatprep.subr.mxu0 0.0
    %801 = vmatpush1.xpose.msra.mxu0 0.0
    %802 = vmatprep.subr.mxu0 0.0
    %803 = vmatpush1.xpose.msra.mxu0 0.0
    %804 = vmatprep.subr.mxu0 0.0
    %805 = vmatpush1.xpose.msra.mxu0 0.0
    %806 = vmatprep.subr.mxu0 0.0
    %807 = vmatpush1.xpose.msra.mxu0 0.0
    %808 = vmatprep.subr.mxu0 0.0
    %809 = vmatpush1.xpose.msra.mxu0 0.0
    %810 = vmatprep.mubr.f32.mxu0 0.0
    %811 = vmatmul.mubr.f32.gmra.mrb[0].mxu0 %v742
    %v812 = vpop.f32.mrb[0].mxu0
    %v813 = vadd.f32 0.0, %v812
    %v814 = vpop.f32.mrb[0].mxu0
    %815 = vdwg.mxu0
    %v816 = vsel %vm160, %v813, -inf
    %817 = vmax.xlane.f32.xlu0 %v816
    %v818 = vpop.xlane.xlu0 %817
    %v819 = vsub.f32 %v813, %v818
    %v820 = vmul.f32 %v819, 1.442695
    %v821 = vpow.pop %v820
    %v822 = vsel %vm160, %v821, 0.0
    %823 = vadd.xlane.f32.xlu0 %v822
    %v824 = vpop.xlane.xlu0 %823
    %v825 = vrcp.pop %v824
    %v826 = vmul.f32 %v821, %v825
    %827 = vrot.lane.b32.xlu0 %v738, 64
    %v828 = vpop.permute.xlu0 %827
    %v831 = vsel %vm160, %v826, 0
    %833 = vmatprep.subr.mxu0 0.0
    %834 = vmatpush1.msra.mxu0 %v828
    %835 = vmatprep.subr.mxu0 0.0
    %836 = vmatpush1.msra.mxu0 0.0
    %837 = vmatprep.subr.mxu0 0.0
    %838 = vmatpush1.msra.mxu0 0.0
    %839 = vmatprep.subr.mxu0 0.0
    %840 = vmatpush1.msra.mxu0 0.0
    %841 = vmatprep.subr.mxu0 0.0
    %842 = vmatpush1.msra.mxu0 0.0
    %843 = vmatprep.subr.mxu0 0.0
    %844 = vmatpush1.msra.mxu0 0.0
    %845 = vmatprep.subr.mxu0 0.0
    %846 = vmatpush1.msra.mxu0 0.0
    %847 = vmatprep.subr.mxu0 0.0
    %848 = vmatpush1.msra.mxu0 0.0
    %849 = vmatprep.subr.mxu0 0.0
    %850 = vmatpush1.msra.mxu0 0.0
    %851 = vmatprep.subr.mxu0 0.0
    %852 = vmatpush1.msra.mxu0 0.0
    %853 = vmatprep.subr.mxu0 0.0
    %854 = vmatpush1.msra.mxu0 0.0
    %855 = vmatprep.subr.mxu0 0.0
    %856 = vmatpush1.msra.mxu0 0.0
    %857 = vmatprep.subr.mxu0 0.0
    %858 = vmatpush1.msra.mxu0 0.0
    %859 = vmatprep.subr.mxu0 0.0
    %860 = vmatpush1.msra.mxu0 0.0
    %861 = vmatprep.subr.mxu0 0.0
    %862 = vmatpush1.msra.mxu0 0.0
    %863 = vmatprep.subr.mxu0 0.0
    %864 = vmatpush1.msra.mxu0 0.0
    %865 = vmatprep.subr.mxu0 0.0
    %866 = vmatpush1.msra.mxu0 0.0
    %867 = vmatprep.subr.mxu0 0.0
    %868 = vmatpush1.msra.mxu0 0.0
    %869 = vmatprep.subr.mxu0 0.0
    %870 = vmatpush1.msra.mxu0 0.0
    %871 = vmatprep.subr.mxu0 0.0
    %872 = vmatpush1.msra.mxu0 0.0
    %873 = vmatprep.subr.mxu0 0.0
    %874 = vmatpush1.msra.mxu0 0.0
    %875 = vmatprep.subr.mxu0 0.0
    %876 = vmatpush1.msra.mxu0 0.0
    %877 = vmatprep.subr.mxu0 0.0
    %878 = vmatpush1.msra.mxu0 0.0
    %879 = vmatprep.subr.mxu0 0.0
    %880 = vmatpush1.msra.mxu0 0.0
    %881 = vmatprep.subr.mxu0 0.0
    %882 = vmatpush1.msra.mxu0 0.0
    %883 = vmatprep.subr.mxu0 0.0
    %884 = vmatpush1.msra.mxu0 0.0
    %885 = vmatprep.subr.mxu0 0.0
    %886 = vmatpush1.msra.mxu0 0.0
    %887 = vmatprep.subr.mxu0 0.0
    %888 = vmatpush1.msra.mxu0 0.0
    %889 = vmatprep.subr.mxu0 0.0
    %890 = vmatpush1.msra.mxu0 0.0
    %891 = vmatprep.subr.mxu0 0.0
    %892 = vmatpush1.msra.mxu0 0.0
    %893 = vmatprep.subr.mxu0 0.0
    %894 = vmatpush1.msra.mxu0 0.0
    %895 = vmatprep.subr.mxu0 0.0
    %896 = vmatpush1.msra.mxu0 0.0
    %897 = vmatprep.mubr.f32.mxu0 0.0
    %898 = vmatmul.mubr.f32.gmra.mrb[0].mxu0 %v831
    %v899 = vpop.f32.mrb[0].mxu0
    %v900 = vadd.f32 0.0, %v899
    %v901 = vpop.f32.mrb[0].mxu0
    %902 = vdwg.mxu0
    %v904 = vrot.slane %v900, 2
    %905 = vrot.lane.b32.xlu0 %v904, 8
    %v906 = vpop.permute.xlu0 %905
    %v908 = vrot.slane %v900, 4
    %909 = vrot.lane.b32.xlu0 %v908, 16
    %v910 = vpop.permute.xlu0 %909
    %v912 = vrot.slane %v900, 6
    %913 = vrot.lane.b32.xlu0 %v912, 24
    %v914 = vpop.permute.xlu0 %913
    %v916 = vsel %vm160, %v900, %v906
    %v917 = vsel %vm336, %v916, %v910
    %v918 = vsel %vm338, %v917, %v914
    %v920 = vrot.slane %v135, 6
    %921 = vrot.lane.b32.xlu0 %v920, 120
    %v922 = vpop.permute.xlu0 %921
    %v924 = vrot.slane %v135, 4
    %925 = vrot.lane.b32.xlu0 %v924, 112
    %v926 = vpop.permute.xlu0 %925
    %v928 = vrot.slane %v135, 2
    %929 = vrot.lane.b32.xlu0 %v928, 104
    %v930 = vpop.permute.xlu0 %929
    %v932 = vsel %vm151, %v135, %v922
    %v933 = vsel %vm153, %v932, %v926
    %v934 = vsel %vm155, %v933, %v930
    %936 = vrot.lane.b32.xlu0 %v934, 96
    %v937 = vpop.permute.xlu0 %936
    %v938 = vsel %vm160, %v934, 0
    %v940 = vsel %vm160, %v937, 0
    %942 = vmatprep.subr.mxu0 0.0
    %943 = vmatpush1.xpose.msra.mxu0 %v940
    %944 = vmatprep.subr.mxu0 0.0
    %945 = vmatpush1.xpose.msra.mxu0 0.0
    %946 = vmatprep.subr.mxu0 0.0
    %947 = vmatpush1.xpose.msra.mxu0 0.0
    %948 = vmatprep.subr.mxu0 0.0
    %949 = vmatpush1.xpose.msra.mxu0 0.0
    %950 = vmatprep.subr.mxu0 0.0
    %951 = vmatpush1.xpose.msra.mxu0 0.0
    %952 = vmatprep.subr.mxu0 0.0
    %953 = vmatpush1.xpose.msra.mxu0 0.0
    %954 = vmatprep.subr.mxu0 0.0
    %955 = vmatpush1.xpose.msra.mxu0 0.0
    %956 = vmatprep.subr.mxu0 0.0
    %957 = vmatpush1.xpose.msra.mxu0 0.0
    %958 = vmatprep.subr.mxu0 0.0
    %959 = vmatpush1.xpose.msra.mxu0 0.0
    %960 = vmatprep.subr.mxu0 0.0
    %961 = vmatpush1.xpose.msra.mxu0 0.0
    %962 = vmatprep.subr.mxu0 0.0
    %963 = vmatpush1.xpose.msra.mxu0 0.0
    %964 = vmatprep.subr.mxu0 0.0
    %965 = vmatpush1.xpose.msra.mxu0 0.0
    %966 = vmatprep.subr.mxu0 0.0
    %967 = vmatpush1.xpose.msra.mxu0 0.0
    %968 = vmatprep.subr.mxu0 0.0
    %969 = vmatpush1.xpose.msra.mxu0 0.0
    %970 = vmatprep.subr.mxu0 0.0
    %971 = vmatpush1.xpose.msra.mxu0 0.0
    %972 = vmatprep.subr.mxu0 0.0
    %973 = vmatpush1.xpose.msra.mxu0 0.0
    %974 = vmatprep.subr.mxu0 0.0
    %975 = vmatpush1.xpose.msra.mxu0 0.0
    %976 = vmatprep.subr.mxu0 0.0
    %977 = vmatpush1.xpose.msra.mxu0 0.0
    %978 = vmatprep.subr.mxu0 0.0
    %979 = vmatpush1.xpose.msra.mxu0 0.0
    %980 = vmatprep.subr.mxu0 0.0
    %981 = vmatpush1.xpose.msra.mxu0 0.0
    %982 = vmatprep.subr.mxu0 0.0
    %983 = vmatpush1.xpose.msra.mxu0 0.0
    %984 = vmatprep.subr.mxu0 0.0
    %985 = vmatpush1.xpose.msra.mxu0 0.0
    %986 = vmatprep.subr.mxu0 0.0
    %987 = vmatpush1.xpose.msra.mxu0 0.0
    %988 = vmatprep.subr.mxu0 0.0
    %989 = vmatpush1.xpose.msra.mxu0 0.0
    %990 = vmatprep.subr.mxu0 0.0
    %991 = vmatpush1.xpose.msra.mxu0 0.0
    %992 = vmatprep.subr.mxu0 0.0
    %993 = vmatpush1.xpose.msra.mxu0 0.0
    %994 = vmatprep.subr.mxu0 0.0
    %995 = vmatpush1.xpose.msra.mxu0 0.0
    %996 = vmatprep.subr.mxu0 0.0
    %997 = vmatpush1.xpose.msra.mxu0 0.0
    %998 = vmatprep.subr.mxu0 0.0
    %999 = vmatpush1.xpose.msra.mxu0 0.0
    %1000 = vmatprep.subr.mxu0 0.0
    %1001 = vmatpush1.xpose.msra.mxu0 0.0
    %1002 = vmatprep.subr.mxu0 0.0
    %1003 = vmatpush1.xpose.msra.mxu0 0.0
    %1004 = vmatprep.subr.mxu0 0.0
    %1005 = vmatpush1.xpose.msra.mxu0 0.0
    %1006 = vmatprep.mubr.f32.mxu0 0.0
    %1007 = vmatmul.mubr.f32.gmra.mrb[0].mxu0 %v938
    %v1008 = vpop.f32.mrb[0].mxu0
    %v1009 = vadd.f32 0.0, %v1008
    %v1010 = vpop.f32.mrb[0].mxu0
    %1011 = vdwg.mxu0
    %v1012 = vsel %vm160, %v1009, -inf
    %1013 = vmax.xlane.f32.xlu0 %v1012
    %v1014 = vpop.xlane.xlu0 %1013
    %v1015 = vsub.f32 %v1009, %v1014
    %v1016 = vmul.f32 %v1015, 1.442695
    %v1017 = vpow.pop %v1016
    %v1018 = vsel %vm160, %v1017, 0.0
    %1019 = vadd.xlane.f32.xlu0 %v1018
    %v1020 = vpop.xlane.xlu0 %1019
    %v1021 = vrcp.pop %v1020
    %v1022 = vmul.f32 %v1017, %v1021
    %1023 = vrot.lane.b32.xlu0 %v934, 64
    %v1024 = vpop.permute.xlu0 %1023
    %v1027 = vsel %vm160, %v1022, 0
    %1029 = vmatprep.subr.mxu0 0.0
    %1030 = vmatpush1.msra.mxu0 %v1024
    %1031 = vmatprep.subr.mxu0 0.0
    %1032 = vmatpush1.msra.mxu0 0.0
    %1033 = vmatprep.subr.mxu0 0.0
    %1034 = vmatpush1.msra.mxu0 0.0
    %1035 = vmatprep.subr.mxu0 0.0
    %1036 = vmatpush1.msra.mxu0 0.0
    %1037 = vmatprep.subr.mxu0 0.0
    %1038 = vmatpush1.msra.mxu0 0.0
    %1039 = vmatprep.subr.mxu0 0.0
    %1040 = vmatpush1.msra.mxu0 0.0
    %1041 = vmatprep.subr.mxu0 0.0
    %1042 = vmatpush1.msra.mxu0 0.0
    %1043 = vmatprep.subr.mxu0 0.0
    %1044 = vmatpush1.msra.mxu0 0.0
    %1045 = vmatprep.subr.mxu0 0.0
    %1046 = vmatpush1.msra.mxu0 0.0
    %1047 = vmatprep.subr.mxu0 0.0
    %1048 = vmatpush1.msra.mxu0 0.0
    %1049 = vmatprep.subr.mxu0 0.0
    %1050 = vmatpush1.msra.mxu0 0.0
    %1051 = vmatprep.subr.mxu0 0.0
    %1052 = vmatpush1.msra.mxu0 0.0
    %1053 = vmatprep.subr.mxu0 0.0
    %1054 = vmatpush1.msra.mxu0 0.0
    %1055 = vmatprep.subr.mxu0 0.0
    %1056 = vmatpush1.msra.mxu0 0.0
    %1057 = vmatprep.subr.mxu0 0.0
    %1058 = vmatpush1.msra.mxu0 0.0
    %1059 = vmatprep.subr.mxu0 0.0
    %1060 = vmatpush1.msra.mxu0 0.0
    %1061 = vmatprep.subr.mxu0 0.0
    %1062 = vmatpush1.msra.mxu0 0.0
    %1063 = vmatprep.subr.mxu0 0.0
    %1064 = vmatpush1.msra.mxu0 0.0
    %1065 = vmatprep.subr.mxu0 0.0
    %1066 = vmatpush1.msra.mxu0 0.0
    %1067 = vmatprep.subr.mxu0 0.0
    %1068 = vmatpush1.msra.mxu0 0.0
    %1069 = vmatprep.subr.mxu0 0.0
    %1070 = vmatpush1.msra.mxu0 0.0
    %1071 = vmatprep.subr.mxu0 0.0
    %1072 = vmatpush1.msra.mxu0 0.0
    %1073 = vmatprep.subr.mxu0 0.0
    %1074 = vmatpush1.msra.mxu0 0.0
    %1075 = vmatprep.subr.mxu0 0.0
    %1076 = vmatpush1.msra.mxu0 0.0
    %1077 = vmatprep.subr.mxu0 0.0
    %1078 = vmatpush1.msra.mxu0 0.0
    %1079 = vmatprep.subr.mxu0 0.0
    %1080 = vmatpush1.msra.mxu0 0.0
    %1081 = vmatprep.subr.mxu0 0.0
    %1082 = vmatpush1.msra.mxu0 0.0
    %1083 = vmatprep.subr.mxu0 0.0
    %1084 = vmatpush1.msra.mxu0 0.0
    %1085 = vmatprep.subr.mxu0 0.0
    %1086 = vmatpush1.msra.mxu0 0.0
    %1087 = vmatprep.subr.mxu0 0.0
    %1088 = vmatpush1.msra.mxu0 0.0
    %1089 = vmatprep.subr.mxu0 0.0
    %1090 = vmatpush1.msra.mxu0 0.0
    %1091 = vmatprep.subr.mxu0 0.0
    %1092 = vmatpush1.msra.mxu0 0.0
    %1093 = vmatprep.mubr.f32.mxu0 0.0
    %1094 = vmatmul.mubr.f32.gmra.mrb[0].mxu0 %v1027
    %v1095 = vpop.f32.mrb[0].mxu0
    %v1096 = vadd.f32 0.0, %v1095
    %v1097 = vpop.f32.mrb[0].mxu0
    %1098 = vdwg.mxu0
    %v1100 = vrot.slane %v1096, 2
    %1101 = vrot.lane.b32.xlu0 %v1100, 8
    %v1102 = vpop.permute.xlu0 %1101
    %v1104 = vrot.slane %v1096, 4
    %1105 = vrot.lane.b32.xlu0 %v1104, 16
    %v1106 = vpop.permute.xlu0 %1105
    %v1108 = vrot.slane %v1096, 6
    %1109 = vrot.lane.b32.xlu0 %v1108, 24
    %v1110 = vpop.permute.xlu0 %1109
    %v1112 = vsel %vm160, %v1096, %v1102
    %v1113 = vsel %vm336, %v1112, %v1106
    %v1114 = vsel %vm338, %v1113, %v1110
    %1116 = vrot.lane.b32.xlu0 %v135, 120
    %v1117 = vpop.permute.xlu0 %1116
    %1119 = vrot.lane.b32.xlu0 %v920, 112
    %v1120 = vpop.permute.xlu0 %1119
    %1122 = vrot.lane.b32.xlu0 %v924, 104
    %v1123 = vpop.permute.xlu0 %1122
    %v1125 = vsel %vm151, %v928, %v1117
    %v1126 = vsel %vm153, %v1125, %v1120
    %v1127 = vsel %vm155, %v1126, %v1123
    %1129 = vrot.lane.b32.xlu0 %v1127, 96
    %v1130 = vpop.permute.xlu0 %1129
    %v1131 = vsel %vm160, %v1127, 0
    %v1133 = vsel %vm160, %v1130, 0
    %1135 = vmatprep.subr.mxu0 0.0
    %1136 = vmatpush1.xpose.msra.mxu0 %v1133
    %1137 = vmatprep.subr.mxu0 0.0
    %1138 = vmatpush1.xpose.msra.mxu0 0.0
    %1139 = vmatprep.subr.mxu0 0.0
    %1140 = vmatpush1.xpose.msra.mxu0 0.0
    %1141 = vmatprep.subr.mxu0 0.0
    %1142 = vmatpush1.xpose.msra.mxu0 0.0
    %1143 = vmatprep.subr.mxu0 0.0
    %1144 = vmatpush1.xpose.msra.mxu0 0.0
    %1145 = vmatprep.subr.mxu0 0.0
    %1146 = vmatpush1.xpose.msra.mxu0 0.0
    %1147 = vmatprep.subr.mxu0 0.0
    %1148 = vmatpush1.xpose.msra.mxu0 0.0
    %1149 = vmatprep.subr.mxu0 0.0
    %1150 = vmatpush1.xpose.msra.mxu0 0.0
    %1151 = vmatprep.subr.mxu0 0.0
    %1152 = vmatpush1.xpose.msra.mxu0 0.0
    %1153 = vmatprep.subr.mxu0 0.0
    %1154 = vmatpush1.xpose.msra.mxu0 0.0
    %1155 = vmatprep.subr.mxu0 0.0
    %1156 = vmatpush1.xpose.msra.mxu0 0.0
    %1157 = vmatprep.subr.mxu0 0.0
    %1158 = vmatpush1.xpose.msra.mxu0 0.0
    %1159 = vmatprep.subr.mxu0 0.0
    %1160 = vmatpush1.xpose.msra.mxu0 0.0
    %1161 = vmatprep.subr.mxu0 0.0
    %1162 = vmatpush1.xpose.msra.mxu0 0.0
    %1163 = vmatprep.subr.mxu0 0.0
    %1164 = vmatpush1.xpose.msra.mxu0 0.0
    %1165 = vmatprep.subr.mxu0 0.0
    %1166 = vmatpush1.xpose.msra.mxu0 0.0
    %1167 = vmatprep.subr.mxu0 0.0
    %1168 = vmatpush1.xpose.msra.mxu0 0.0
    %1169 = vmatprep.subr.mxu0 0.0
    %1170 = vmatpush1.xpose.msra.mxu0 0.0
    %1171 = vmatprep.subr.mxu0 0.0
    %1172 = vmatpush1.xpose.msra.mxu0 0.0
    %1173 = vmatprep.subr.mxu0 0.0
    %1174 = vmatpush1.xpose.msra.mxu0 0.0
    %1175 = vmatprep.subr.mxu0 0.0
    %1176 = vmatpush1.xpose.msra.mxu0 0.0
    %1177 = vmatprep.subr.mxu0 0.0
    %1178 = vmatpush1.xpose.msra.mxu0 0.0
    %1179 = vmatprep.subr.mxu0 0.0
    %1180 = vmatpush1.xpose.msra.mxu0 0.0
    %1181 = vmatprep.subr.mxu0 0.0
    %1182 = vmatpush1.xpose.msra.mxu0 0.0
    %1183 = vmatprep.subr.mxu0 0.0
    %1184 = vmatpush1.xpose.msra.mxu0 0.0
    %1185 = vmatprep.subr.mxu0 0.0
    %1186 = vmatpush1.xpose.msra.mxu0 0.0
    %1187 = vmatprep.subr.mxu0 0.0
    %1188 = vmatpush1.xpose.msra.mxu0 0.0
    %1189 = vmatprep.subr.mxu0 0.0
    %1190 = vmatpush1.xpose.msra.mxu0 0.0
    %1191 = vmatprep.subr.mxu0 0.0
    %1192 = vmatpush1.xpose.msra.mxu0 0.0
    %1193 = vmatprep.subr.mxu0 0.0
    %1194 = vmatpush1.xpose.msra.mxu0 0.0
    %1195 = vmatprep.subr.mxu0 0.0
    %1196 = vmatpush1.xpose.msra.mxu0 0.0
    %1197 = vmatprep.subr.mxu0 0.0
    %1198 = vmatpush1.xpose.msra.mxu0 0.0
    %1199 = vmatprep.mubr.f32.mxu0 0.0
    %1200 = vmatmul.mubr.f32.gmra.mrb[0].mxu0 %v1131
    %v1201 = vpop.f32.mrb[0].mxu0
    %v1202 = vadd.f32 0.0, %v1201
    %v1203 = vpop.f32.mrb[0].mxu0
    %1204 = vdwg.mxu0
    %v1205 = vsel %vm160, %v1202, -inf
    %1206 = vmax.xlane.f32.xlu0 %v1205
    %v1207 = vpop.xlane.xlu0 %1206
    %v1208 = vsub.f32 %v1202, %v1207
    %v1209 = vmul.f32 %v1208, 1.442695
    %v1210 = vpow.pop %v1209
    %v1211 = vsel %vm160, %v1210, 0.0
    %1212 = vadd.xlane.f32.xlu0 %v1211
    %v1213 = vpop.xlane.xlu0 %1212
    %v1214 = vrcp.pop %v1213
    %v1215 = vmul.f32 %v1210, %v1214
    %1216 = vrot.lane.b32.xlu0 %v1127, 64
    %v1217 = vpop.permute.xlu0 %1216
    %v1220 = vsel %vm160, %v1215, 0
    %1222 = vmatprep.subr.mxu0 0.0
    %1223 = vmatpush1.msra.mxu0 %v1217
    %1224 = vmatprep.subr.mxu0 0.0
    %1225 = vmatpush1.msra.mxu0 0.0
    %1226 = vmatprep.subr.mxu0 0.0
    %1227 = vmatpush1.msra.mxu0 0.0
    %1228 = vmatprep.subr.mxu0 0.0
    %1229 = vmatpush1.msra.mxu0 0.0
    %1230 = vmatprep.subr.mxu0 0.0
    %1231 = vmatpush1.msra.mxu0 0.0
    %1232 = vmatprep.subr.mxu0 0.0
    %1233 = vmatpush1.msra.mxu0 0.0
    %1234 = vmatprep.subr.mxu0 0.0
    %1235 = vmatpush1.msra.mxu0 0.0
    %1236 = vmatprep.subr.mxu0 0.0
    %1237 = vmatpush1.msra.mxu0 0.0
    %1238 = vmatprep.subr.mxu0 0.0
    %1239 = vmatpush1.msra.mxu0 0.0
    %1240 = vmatprep.subr.mxu0 0.0
    %1241 = vmatpush1.msra.mxu0 0.0
    %1242 = vmatprep.subr.mxu0 0.0
    %1243 = vmatpush1.msra.mxu0 0.0
    %1244 = vmatprep.subr.mxu0 0.0
    %1245 = vmatpush1.msra.mxu0 0.0
    %1246 = vmatprep.subr.mxu0 0.0
    %1247 = vmatpush1.msra.mxu0 0.0
    %1248 = vmatprep.subr.mxu0 0.0
    %1249 = vmatpush1.msra.mxu0 0.0
    %1250 = vmatprep.subr.mxu0 0.0
    %1251 = vmatpush1.msra.mxu0 0.0
    %1252 = vmatprep.subr.mxu0 0.0
    %1253 = vmatpush1.msra.mxu0 0.0
    %1254 = vmatprep.subr.mxu0 0.0
    %1255 = vmatpush1.msra.mxu0 0.0
    %1256 = vmatprep.subr.mxu0 0.0
    %1257 = vmatpush1.msra.mxu0 0.0
    %1258 = vmatprep.subr.mxu0 0.0
    %1259 = vmatpush1.msra.mxu0 0.0
    %1260 = vmatprep.subr.mxu0 0.0
    %1261 = vmatpush1.msra.mxu0 0.0
    %1262 = vmatprep.subr.mxu0 0.0
    %1263 = vmatpush1.msra.mxu0 0.0
    %1264 = vmatprep.subr.mxu0 0.0
    %1265 = vmatpush1.msra.mxu0 0.0
    %1266 = vmatprep.subr.mxu0 0.0
    %1267 = vmatpush1.msra.mxu0 0.0
    %1268 = vmatprep.subr.mxu0 0.0
    %1269 = vmatpush1.msra.mxu0 0.0
    %1270 = vmatprep.subr.mxu0 0.0
    %1271 = vmatpush1.msra.mxu0 0.0
    %1272 = vmatprep.subr.mxu0 0.0
    %1273 = vmatpush1.msra.mxu0 0.0
    %1274 = vmatprep.subr.mxu0 0.0
    %1275 = vmatpush1.msra.mxu0 0.0
    %1276 = vmatprep.subr.mxu0 0.0
    %1277 = vmatpush1.msra.mxu0 0.0
    %1278 = vmatprep.subr.mxu0 0.0
    %1279 = vmatpush1.msra.mxu0 0.0
    %1280 = vmatprep.subr.mxu0 0.0
    %1281 = vmatpush1.msra.mxu0 0.0
    %1282 = vmatprep.subr.mxu0 0.0
    %1283 = vmatpush1.msra.mxu0 0.0
    %1284 = vmatprep.subr.mxu0 0.0
    %1285 = vmatpush1.msra.mxu0 0.0
    %1286 = vmatprep.mubr.f32.mxu0 0.0
    %1287 = vmatmul.mubr.f32.gmra.mrb[0].mxu0 %v1220
    %v1288 = vpop.f32.mrb[0].mxu0
    %v1289 = vadd.f32 0.0, %v1288
    %v1290 = vpop.f32.mrb[0].mxu0
    %1291 = vdwg.mxu0
    %v1293 = vrot.slane %v1289, 2
    %1294 = vrot.lane.b32.xlu0 %v1293, 8
    %v1295 = vpop.permute.xlu0 %1294
    %v1297 = vrot.slane %v1289, 4
    %1298 = vrot.lane.b32.xlu0 %v1297, 16
    %v1299 = vpop.permute.xlu0 %1298
    %v1301 = vrot.slane %v1289, 6
    %1302 = vrot.lane.b32.xlu0 %v1301, 24
    %v1303 = vpop.permute.xlu0 %1302
    %v1305 = vsel %vm160, %v1289, %v1295
    %v1306 = vsel %vm336, %v1305, %v1299
    %v1307 = vsel %vm338, %v1306, %v1303
    %1309 = vrot.lane.b32.xlu0 %v928, 120
    %v1310 = vpop.permute.xlu0 %1309
    %1312 = vrot.lane.b32.xlu0 %v135, 112
    %v1313 = vpop.permute.xlu0 %1312
    %1315 = vrot.lane.b32.xlu0 %v920, 104
    %v1316 = vpop.permute.xlu0 %1315
    %v1318 = vsel %vm151, %v924, %v1310
    %v1319 = vsel %vm153, %v1318, %v1313
    %v1320 = vsel %vm155, %v1319, %v1316
    %1322 = vrot.lane.b32.xlu0 %v1320, 96
    %v1323 = vpop.permute.xlu0 %1322
    %v1324 = vsel %vm160, %v1320, 0
    %v1326 = vsel %vm160, %v1323, 0
    %1328 = vmatprep.subr.mxu0 0.0
    %1329 = vmatpush1.xpose.msra.mxu0 %v1326
    %1330 = vmatprep.subr.mxu0 0.0
    %1331 = vmatpush1.xpose.msra.mxu0 0.0
    %1332 = vmatprep.subr.mxu0 0.0
    %1333 = vmatpush1.xpose.msra.mxu0 0.0
    %1334 = vmatprep.subr.mxu0 0.0
    %1335 = vmatpush1.xpose.msra.mxu0 0.0
    %1336 = vmatprep.subr.mxu0 0.0
    %1337 = vmatpush1.xpose.msra.mxu0 0.0
    %1338 = vmatprep.subr.mxu0 0.0
    %1339 = vmatpush1.xpose.msra.mxu0 0.0
    %1340 = vmatprep.subr.mxu0 0.0
    %1341 = vmatpush1.xpose.msra.mxu0 0.0
    %1342 = vmatprep.subr.mxu0 0.0
    %1343 = vmatpush1.xpose.msra.mxu0 0.0
    %1344 = vmatprep.subr.mxu0 0.0
    %1345 = vmatpush1.xpose.msra.mxu0 0.0
    %1346 = vmatprep.subr.mxu0 0.0
    %1347 = vmatpush1.xpose.msra.mxu0 0.0
    %1348 = vmatprep.subr.mxu0 0.0
    %1349 = vmatpush1.xpose.msra.mxu0 0.0
    %1350 = vmatprep.subr.mxu0 0.0
    %1351 = vmatpush1.xpose.msra.mxu0 0.0
    %1352 = vmatprep.subr.mxu0 0.0
    %1353 = vmatpush1.xpose.msra.mxu0 0.0
    %1354 = vmatprep.subr.mxu0 0.0
    %1355 = vmatpush1.xpose.msra.mxu0 0.0
    %1356 = vmatprep.subr.mxu0 0.0
    %1357 = vmatpush1.xpose.msra.mxu0 0.0
    %1358 = vmatprep.subr.mxu0 0.0
    %1359 = vmatpush1.xpose.msra.mxu0 0.0
    %1360 = vmatprep.subr.mxu0 0.0
    %1361 = vmatpush1.xpose.msra.mxu0 0.0
    %1362 = vmatprep.subr.mxu0 0.0
    %1363 = vmatpush1.xpose.msra.mxu0 0.0
    %1364 = vmatprep.subr.mxu0 0.0
    %1365 = vmatpush1.xpose.msra.mxu0 0.0
    %1366 = vmatprep.subr.mxu0 0.0
    %1367 = vmatpush1.xpose.msra.mxu0 0.0
    %1368 = vmatprep.subr.mxu0 0.0
    %1369 = vmatpush1.xpose.msra.mxu0 0.0
    %1370 = vmatprep.subr.mxu0 0.0
    %1371 = vmatpush1.xpose.msra.mxu0 0.0
    %1372 = vmatprep.subr.mxu0 0.0
    %1373 = vmatpush1.xpose.msra.mxu0 0.0
    %1374 = vmatprep.subr.mxu0 0.0
    %1375 = vmatpush1.xpose.msra.mxu0 0.0
    %1376 = vmatprep.subr.mxu0 0.0
    %1377 = vmatpush1.xpose.msra.mxu0 0.0
    %1378 = vmatprep.subr.mxu0 0.0
    %1379 = vmatpush1.xpose.msra.mxu0 0.0
    %1380 = vmatprep.subr.mxu0 0.0
    %1381 = vmatpush1.xpose.msra.mxu0 0.0
    %1382 = vmatprep.subr.mxu0 0.0
    %1383 = vmatpush1.xpose.msra.mxu0 0.0
    %1384 = vmatprep.subr.mxu0 0.0
    %1385 = vmatpush1.xpose.msra.mxu0 0.0
    %1386 = vmatprep.subr.mxu0 0.0
    %1387 = vmatpush1.xpose.msra.mxu0 0.0
    %1388 = vmatprep.subr.mxu0 0.0
    %1389 = vmatpush1.xpose.msra.mxu0 0.0
    %1390 = vmatprep.subr.mxu0 0.0
    %1391 = vmatpush1.xpose.msra.mxu0 0.0
    %1392 = vmatprep.mubr.f32.mxu0 0.0
    %1393 = vmatmul.mubr.f32.gmra.mrb[0].mxu0 %v1324
    %v1394 = vpop.f32.mrb[0].mxu0
    %v1395 = vadd.f32 0.0, %v1394
    %v1396 = vpop.f32.mrb[0].mxu0
    %1397 = vdwg.mxu0
    %v1398 = vsel %vm160, %v1395, -inf
    %1399 = vmax.xlane.f32.xlu0 %v1398
    %v1400 = vpop.xlane.xlu0 %1399
    %v1401 = vsub.f32 %v1395, %v1400
    %v1402 = vmul.f32 %v1401, 1.442695
    %v1403 = vpow.pop %v1402
    %v1404 = vsel %vm160, %v1403, 0.0
    %1405 = vadd.xlane.f32.xlu0 %v1404
    %v1406 = vpop.xlane.xlu0 %1405
    %v1407 = vrcp.pop %v1406
    %v1408 = vmul.f32 %v1403, %v1407
    %1409 = vrot.lane.b32.xlu0 %v1320, 64
    %v1410 = vpop.permute.xlu0 %1409
    %v1413 = vsel %vm160, %v1408, 0
    %1415 = vmatprep.subr.mxu0 0.0
    %1416 = vmatpush1.msra.mxu0 %v1410
    %1417 = vmatprep.subr.mxu0 0.0
    %1418 = vmatpush1.msra.mxu0 0.0
    %1419 = vmatprep.subr.mxu0 0.0
    %1420 = vmatpush1.msra.mxu0 0.0
    %1421 = vmatprep.subr.mxu0 0.0
    %1422 = vmatpush1.msra.mxu0 0.0
    %1423 = vmatprep.subr.mxu0 0.0
    %1424 = vmatpush1.msra.mxu0 0.0
    %1425 = vmatprep.subr.mxu0 0.0
    %1426 = vmatpush1.msra.mxu0 0.0
    %1427 = vmatprep.subr.mxu0 0.0
    %1428 = vmatpush1.msra.mxu0 0.0
    %1429 = vmatprep.subr.mxu0 0.0
    %1430 = vmatpush1.msra.mxu0 0.0
    %1431 = vmatprep.subr.mxu0 0.0
    %1432 = vmatpush1.msra.mxu0 0.0
    %1433 = vmatprep.subr.mxu0 0.0
    %1434 = vmatpush1.msra.mxu0 0.0
    %1435 = vmatprep.subr.mxu0 0.0
    %1436 = vmatpush1.msra.mxu0 0.0
    %1437 = vmatprep.subr.mxu0 0.0
    %1438 = vmatpush1.msra.mxu0 0.0
    %1439 = vmatprep.subr.mxu0 0.0
    %1440 = vmatpush1.msra.mxu0 0.0
    %1441 = vmatprep.subr.mxu0 0.0
    %1442 = vmatpush1.msra.mxu0 0.0
    %1443 = vmatprep.subr.mxu0 0.0
    %1444 = vmatpush1.msra.mxu0 0.0
    %1445 = vmatprep.subr.mxu0 0.0
    %1446 = vmatpush1.msra.mxu0 0.0
    %1447 = vmatprep.subr.mxu0 0.0
    %1448 = vmatpush1.msra.mxu0 0.0
    %1449 = vmatprep.subr.mxu0 0.0
    %1450 = vmatpush1.msra.mxu0 0.0
    %1451 = vmatprep.subr.mxu0 0.0
    %1452 = vmatpush1.msra.mxu0 0.0
    %1453 = vmatprep.subr.mxu0 0.0
    %1454 = vmatpush1.msra.mxu0 0.0
    %1455 = vmatprep.subr.mxu0 0.0
    %1456 = vmatpush1.msra.mxu0 0.0
    %1457 = vmatprep.subr.mxu0 0.0
    %1458 = vmatpush1.msra.mxu0 0.0
    %1459 = vmatprep.subr.mxu0 0.0
    %1460 = vmatpush1.msra.mxu0 0.0
    %1461 = vmatprep.subr.mxu0 0.0
    %1462 = vmatpush1.msra.mxu0 0.0
    %1463 = vmatprep.subr.mxu0 0.0
    %1464 = vmatpush1.msra.mxu0 0.0
    %1465 = vmatprep.subr.mxu0 0.0
    %1466 = vmatpush1.msra.mxu0 0.0
    %1467 = vmatprep.subr.mxu0 0.0
    %1468 = vmatpush1.msra.mxu0 0.0
    %1469 = vmatprep.subr.mxu0 0.0
    %1470 = vmatpush1.msra.mxu0 0.0
    %1471 = vmatprep.subr.mxu0 0.0
    %1472 = vmatpush1.msra.mxu0 0.0
    %1473 = vmatprep.subr.mxu0 0.0
    %1474 = vmatpush1.msra.mxu0 0.0
    %1475 = vmatprep.subr.mxu0 0.0
    %1476 = vmatpush1.msra.mxu0 0.0
    %1477 = vmatprep.subr.mxu0 0.0
    %1478 = vmatpush1.msra.mxu0 0.0
    %1479 = vmatprep.mubr.f32.mxu0 0.0
    %1480 = vmatmul.mubr.f32.gmra.mrb[0].mxu0 %v1413
    %v1481 = vpop.f32.mrb[0].mxu0
    %v1482 = vadd.f32 0.0, %v1481
    %v1483 = vpop.f32.mrb[0].mxu0
    %1484 = vdwg.mxu0
    %v1486 = vrot.slane %v1482, 2
    %1487 = vrot.lane.b32.xlu0 %v1486, 8
    %v1488 = vpop.permute.xlu0 %1487
    %v1490 = vrot.slane %v1482, 4
    %1491 = vrot.lane.b32.xlu0 %v1490, 16
    %v1492 = vpop.permute.xlu0 %1491
    %v1494 = vrot.slane %v1482, 6
    %1495 = vrot.lane.b32.xlu0 %v1494, 24
    %v1496 = vpop.permute.xlu0 %1495
    %v1498 = vsel %vm160, %v1482, %v1488
    %v1499 = vsel %vm336, %v1498, %v1492
    %v1500 = vsel %vm338, %v1499, %v1496
    %1502 = vrot.lane.b32.xlu0 %v924, 120
    %v1503 = vpop.permute.xlu0 %1502
    %1505 = vrot.lane.b32.xlu0 %v928, 112
    %v1506 = vpop.permute.xlu0 %1505
    %1508 = vrot.lane.b32.xlu0 %v135, 104
    %v1509 = vpop.permute.xlu0 %1508
    %v1511 = vsel %vm151, %v920, %v1503
    %v1512 = vsel %vm153, %v1511, %v1506
    %v1513 = vsel %vm155, %v1512, %v1509
    %1515 = vrot.lane.b32.xlu0 %v1513, 96
    %v1516 = vpop.permute.xlu0 %1515
    %v1517 = vsel %vm160, %v1513, 0
    %v1519 = vsel %vm160, %v1516, 0
    %1521 = vmatprep.subr.mxu0 0.0
    %1522 = vmatpush1.xpose.msra.mxu0 %v1519
    %1523 = vmatprep.subr.mxu0 0.0
    %1524 = vmatpush1.xpose.msra.mxu0 0.0
    %1525 = vmatprep.subr.mxu0 0.0
    %1526 = vmatpush1.xpose.msra.mxu0 0.0
    %1527 = vmatprep.subr.mxu0 0.0
    %1528 = vmatpush1.xpose.msra.mxu0 0.0
    %1529 = vmatprep.subr.mxu0 0.0
    %1530 = vmatpush1.xpose.msra.mxu0 0.0
    %1531 = vmatprep.subr.mxu0 0.0
    %1532 = vmatpush1.xpose.msra.mxu0 0.0
    %1533 = vmatprep.subr.mxu0 0.0
    %1534 = vmatpush1.xpose.msra.mxu0 0.0
    %1535 = vmatprep.subr.mxu0 0.0
    %1536 = vmatpush1.xpose.msra.mxu0 0.0
    %1537 = vmatprep.subr.mxu0 0.0
    %1538 = vmatpush1.xpose.msra.mxu0 0.0
    %1539 = vmatprep.subr.mxu0 0.0
    %1540 = vmatpush1.xpose.msra.mxu0 0.0
    %1541 = vmatprep.subr.mxu0 0.0
    %1542 = vmatpush1.xpose.msra.mxu0 0.0
    %1543 = vmatprep.subr.mxu0 0.0
    %1544 = vmatpush1.xpose.msra.mxu0 0.0
    %1545 = vmatprep.subr.mxu0 0.0
    %1546 = vmatpush1.xpose.msra.mxu0 0.0
    %1547 = vmatprep.subr.mxu0 0.0
    %1548 = vmatpush1.xpose.msra.mxu0 0.0
    %1549 = vmatprep.subr.mxu0 0.0
    %1550 = vmatpush1.xpose.msra.mxu0 0.0
    %1551 = vmatprep.subr.mxu0 0.0
    %1552 = vmatpush1.xpose.msra.mxu0 0.0
    %1553 = vmatprep.subr.mxu0 0.0
    %1554 = vmatpush1.xpose.msra.mxu0 0.0
    %1555 = vmatprep.subr.mxu0 0.0
    %1556 = vmatpush1.xpose.msra.mxu0 0.0
    %1557 = vmatprep.subr.mxu0 0.0
    %1558 = vmatpush1.xpose.msra.mxu0 0.0
    %1559 = vmatprep.subr.mxu0 0.0
    %1560 = vmatpush1.xpose.msra.mxu0 0.0
    %1561 = vmatprep.subr.mxu0 0.0
    %1562 = vmatpush1.xpose.msra.mxu0 0.0
    %1563 = vmatprep.subr.mxu0 0.0
    %1564 = vmatpush1.xpose.msra.mxu0 0.0
    %1565 = vmatprep.subr.mxu0 0.0
    %1566 = vmatpush1.xpose.msra.mxu0 0.0
    %1567 = vmatprep.subr.mxu0 0.0
    %1568 = vmatpush1.xpose.msra.mxu0 0.0
    %1569 = vmatprep.subr.mxu0 0.0
    %1570 = vmatpush1.xpose.msra.mxu0 0.0
    %1571 = vmatprep.subr.mxu0 0.0
    %1572 = vmatpush1.xpose.msra.mxu0 0.0
    %1573 = vmatprep.subr.mxu0 0.0
    %1574 = vmatpush1.xpose.msra.mxu0 0.0
    %1575 = vmatprep.subr.mxu0 0.0
    %1576 = vmatpush1.xpose.msra.mxu0 0.0
    %1577 = vmatprep.subr.mxu0 0.0
    %1578 = vmatpush1.xpose.msra.mxu0 0.0
    %1579 = vmatprep.subr.mxu0 0.0
    %1580 = vmatpush1.xpose.msra.mxu0 0.0
    %1581 = vmatprep.subr.mxu0 0.0
    %1582 = vmatpush1.xpose.msra.mxu0 0.0
    %1583 = vmatprep.subr.mxu0 0.0
    %1584 = vmatpush1.xpose.msra.mxu0 0.0
    %1585 = vmatprep.mubr.f32.mxu0 0.0
    %1586 = vmatmul.mubr.f32.gmra.mrb[0].mxu0 %v1517
    %v1587 = vpop.f32.mrb[0].mxu0
    %v1588 = vadd.f32 0.0, %v1587
    %v1589 = vpop.f32.mrb[0].mxu0
    %1590 = vdwg.mxu0
    %v1591 = vsel %vm160, %v1588, -inf
    %1592 = vmax.xlane.f32.xlu0 %v1591
    %v1593 = vpop.xlane.xlu0 %1592
    %v1594 = vsub.f32 %v1588, %v1593
    %v1595 = vmul.f32 %v1594, 1.442695
    %v1596 = vpow.pop %v1595
    %v1597 = vsel %vm160, %v1596, 0.0
    %1598 = vadd.xlane.f32.xlu0 %v1597
    %v1599 = vpop.xlane.xlu0 %1598
    %v1600 = vrcp.pop %v1599
    %v1601 = vmul.f32 %v1596, %v1600
    %1602 = vrot.lane.b32.xlu0 %v1513, 64
    %v1603 = vpop.permute.xlu0 %1602
    %v1606 = vsel %vm160, %v1601, 0
    %1608 = vmatprep.subr.mxu0 0.0
    %1609 = vmatpush1.msra.mxu0 %v1603
    %1610 = vmatprep.subr.mxu0 0.0
    %1611 = vmatpush1.msra.mxu0 0.0
    %1612 = vmatprep.subr.mxu0 0.0
    %1613 = vmatpush1.msra.mxu0 0.0
    %1614 = vmatprep.subr.mxu0 0.0
    %1615 = vmatpush1.msra.mxu0 0.0
    %1616 = vmatprep.subr.mxu0 0.0
    %1617 = vmatpush1.msra.mxu0 0.0
    %1618 = vmatprep.subr.mxu0 0.0
    %1619 = vmatpush1.msra.mxu0 0.0
    %1620 = vmatprep.subr.mxu0 0.0
    %1621 = vmatpush1.msra.mxu0 0.0
    %1622 = vmatprep.subr.mxu0 0.0
    %1623 = vmatpush1.msra.mxu0 0.0
    %1624 = vmatprep.subr.mxu0 0.0
    %1625 = vmatpush1.msra.mxu0 0.0
    %1626 = vmatprep.subr.mxu0 0.0
    %1627 = vmatpush1.msra.mxu0 0.0
    %1628 = vmatprep.subr.mxu0 0.0
    %1629 = vmatpush1.msra.mxu0 0.0
    %1630 = vmatprep.subr.mxu0 0.0
    %1631 = vmatpush1.msra.mxu0 0.0
    %1632 = vmatprep.subr.mxu0 0.0
    %1633 = vmatpush1.msra.mxu0 0.0
    %1634 = vmatprep.subr.mxu0 0.0
    %1635 = vmatpush1.msra.mxu0 0.0
    %1636 = vmatprep.subr.mxu0 0.0
    %1637 = vmatpush1.msra.mxu0 0.0
    %1638 = vmatprep.subr.mxu0 0.0
    %1639 = vmatpush1.msra.mxu0 0.0
    %1640 = vmatprep.subr.mxu0 0.0
    %1641 = vmatpush1.msra.mxu0 0.0
    %1642 = vmatprep.subr.mxu0 0.0
    %1643 = vmatpush1.msra.mxu0 0.0
    %1644 = vmatprep.subr.mxu0 0.0
    %1645 = vmatpush1.msra.mxu0 0.0
    %1646 = vmatprep.subr.mxu0 0.0
    %1647 = vmatpush1.msra.mxu0 0.0
    %1648 = vmatprep.subr.mxu0 0.0
    %1649 = vmatpush1.msra.mxu0 0.0
    %1650 = vmatprep.subr.mxu0 0.0
    %1651 = vmatpush1.msra.mxu0 0.0
    %1652 = vmatprep.subr.mxu0 0.0
    %1653 = vmatpush1.msra.mxu0 0.0
    %1654 = vmatprep.subr.mxu0 0.0
    %1655 = vmatpush1.msra.mxu0 0.0
    %1656 = vmatprep.subr.mxu0 0.0
    %1657 = vmatpush1.msra.mxu0 0.0
    %1658 = vmatprep.subr.mxu0 0.0
    %1659 = vmatpush1.msra.mxu0 0.0
    %1660 = vmatprep.subr.mxu0 0.0
    %1661 = vmatpush1.msra.mxu0 0.0
    %1662 = vmatprep.subr.mxu0 0.0
    %1663 = vmatpush1.msra.mxu0 0.0
    %1664 = vmatprep.subr.mxu0 0.0
    %1665 = vmatpush1.msra.mxu0 0.0
    %1666 = vmatprep.subr.mxu0 0.0
    %1667 = vmatpush1.msra.mxu0 0.0
    %1668 = vmatprep.subr.mxu0 0.0
    %1669 = vmatpush1.msra.mxu0 0.0
    %1670 = vmatprep.subr.mxu0 0.0
    %1671 = vmatpush1.msra.mxu0 0.0
    %1672 = vmatprep.mubr.f32.mxu0 0.0
    %1673 = vmatmul.mubr.f32.gmra.mrb[0].mxu0 %v1606
    %v1674 = vpop.f32.mrb[0].mxu0
    %v1675 = vadd.f32 0.0, %v1674
    %v1676 = vpop.f32.mrb[0].mxu0
    %1677 = vdwg.mxu0
    %v1679 = vrot.slane %v1675, 2
    %1680 = vrot.lane.b32.xlu0 %v1679, 8
    %v1681 = vpop.permute.xlu0 %1680
    %v1683 = vrot.slane %v1675, 4
    %1684 = vrot.lane.b32.xlu0 %v1683, 16
    %v1685 = vpop.permute.xlu0 %1684
    %v1687 = vrot.slane %v1675, 6
    %1688 = vrot.lane.b32.xlu0 %v1687, 24
    %v1689 = vpop.permute.xlu0 %1688
    %v1691 = vsel %vm160, %v1675, %v1681
    %v1692 = vsel %vm336, %v1691, %v1685
    %v1693 = vsel %vm338, %v1692, %v1689
    %v1695 = vrot.slane %v532, 6
    %v1698 = vrot.slane %v725, 4
    %v1701 = vrot.slane %v918, 2
    %v1704 = vrot.slane %v1307, 6
    %v1707 = vrot.slane %v1500, 4
    %v1710 = vrot.slane %v1693, 2
    %v1712 = vsel %vm151, %v339, %v1695
    %v1713 = vsel %vm153, %v1712, %v1698
    %v1714 = vsel %vm155, %v1713, %v1701
    %v1715 = vsel %vm151, %v1114, %v1704
    %v1716 = vsel %vm153, %v1715, %v1707
    %v1717 = vsel %vm155, %v1716, %v1710
    %1718 = vst.msk [vmem:[#allocation7] sm:$0xff] %vm56, %v1714
    %1719 = vst.msk [vmem:[#allocation7 + $0x8] sm:$0xff] %vm56, %v1717
    // Predicated region
    $region22: #{tpu_custom_call.1} parent=1 // pred_check
      _
    $region23: #{tpu_custom_call.1} parent=1 // pred_check_branch
      %1721 = sbr.rel (0) target = $region25
    $region24: #{tpu_custom_call.1} parent=1 // pred_region
      %s1723 = ssub.s32 256, 256
      %1724 = vsyncadd [#allocation4], %s1723
      %s1725 = sshll.u32 [#allocation7], 4
      %s1726 = int_to_ptr.vmem [resolvable:$true] %s1725
      %1731 = dma.vmem_to_hbm [thread:$0]  %s1726, 256, %s3, [#allocation4], 128, 128, 8
    $region25: #{tpu_custom_call.1} parent=1 // pred_fallthru
      _
    // Predicated region
    $region26: #{tpu_custom_call.1} parent=1 // pred_check
      _
    $region27: #{tpu_custom_call.1} parent=1 // pred_check_branch
      %1733 = sbr.rel (0) target = $region29
    $region28: #{tpu_custom_call.1} parent=1 // pred_region
      %1734 = dma.done [#allocation4], 256
    $region29: #{tpu_custom_call.1} parent=1 // pred_fallthru
      _
    %1735 = vsyncpa [#allocation3], 1
    %1736 = vsyncpa [#allocation6], 1
    %1737 = vsyncpa [#allocation4], 1

</llo_original>
